<compile_context>
chip_gen: v5e
topology: v5e:2x2
jax: 0.10.0
libtpu: 0.0.40
codegen_flags: <defaults>
</compile_context>

<pallas_src>
import math

import jax
import jax.numpy as jnp
from jax import lax
from jax.experimental import pallas as pl
from jax.experimental.pallas import tpu as pltpu

LANE = 128  # padded hidden size: each LSTM gate gets its own 128-lane block


# --------------------------------------------------------------------------
# Fused kernel: one-hot embedding + unrolled LSTM + batched attention + Linear
# --------------------------------------------------------------------------
def _fused_decoder_kernel(tgt_ref,       # (T*B, 1)   int32, row = t*B + b
                          embproj_ref,   # (O, 4*HP)  f32  embedding @ W_ih^T, gate-padded
                          bias_ref,      # (1, 4*HP)  f32  b_ih + b_hh, gate-padded
                          whh_ref,       # (HP, 4*HP) f32  W_hh^T, zero-padded rows/cols
                          wdec_ref,      # (HP, O)    f32  W_out[:, :H]^T, zero-padded rows
                          wctx_ref,      # (HP, O)    f32  W_out[:, H:]^T, zero-padded rows
                          bout_ref,      # (1, O)     f32
                          h0_ref,        # (B, HP)    f32  zero-padded lanes
                          c0_ref,        # (B, HP)    f32  zero-padded lanes
                          enc_ref,       # (B*S, HP)  f32  row = b*S + s, zero-padded lanes
                          amask_ref,     # (B*S, T*B) f32  additive batch-match mask (0 / -1e30)
                          collapse_ref,  # (T*B, T)   f32  column-group collapse matrix
                          out_ref,       # (T*B, O)   f32
                          hT_ref,        # (B, HP)    f32
                          cT_ref,        # (B, HP)    f32
                          attn_ref):     # (B*S, T)   f32
    TB = tgt_ref.shape[0]
    B, HP = h0_ref.shape
    T = TB // B
    O = embproj_ref.shape[0]

    # ---- embedding lookup + input projection: 1 broadcast compare + 1 matmul ----
    iota_o = lax.broadcasted_iota(jnp.int32, (TB, O), 1)
    onehot = (tgt_ref[...] == iota_o).astype(jnp.float32)               # (TB, O)
    gates_x = (jnp.dot(onehot, embproj_ref[...],
                       preferred_element_type=jnp.float32)
               + bias_ref[...])                                          # (TB, 4*HP)

    # ---- LSTM recurrence (fully unrolled; 1 matmul + 3 EUP ops per step) ----
    whh = whh_ref[...]                                                   # (HP, 4*HP)
    h = h0_ref[...]                                                      # (B, HP)
    c = c0_ref[...]                                                      # (B, HP)
    h_rows = []
    for t in range(T):
        gates = (gates_x[t * B:(t + 1) * B, :]
                 + jnp.dot(h, whh, preferred_element_type=jnp.float32))  # (B, 4*HP)
        sig = jax.nn.sigmoid(gates)          # one EUP pass covers i/f/o gates
        th = jnp.tanh(gates)                 # one EUP pass covers g gate
        i_g = sig[:, 0 * HP:1 * HP]          # vreg-aligned slices (no lane shifts)
        f_g = sig[:, 1 * HP:2 * HP]
        g_g = th[:, 2 * HP:3 * HP]
        o_g = sig[:, 3 * HP:4 * HP]
        c = f_g * c + i_g * g_g              # padded lanes stay exactly 0
        h = o_g * jnp.tanh(c)
        h_rows.append(h)

    hT_ref[...] = h
    cT_ref[...] = c

    dec = jnp.concatenate(h_rows, axis=0)                                # (T*B, HP)

    # ---- batched attention via block-diagonal (batch-match) masking ----
    enc = enc_ref[...]                                                   # (B*S, HP)
    scores = lax.dot_general(enc, dec, (((1,), (1,)), ((), ())),
                             preferred_element_type=jnp.float32)         # (B*S, T*B)
    masked = scores + amask_ref[...]                                     # cross-batch -> -1e30
    m = jnp.max(masked, axis=0, keepdims=True)
    e = jnp.exp(masked - m)                                              # cross-batch -> 0.0
    attn = e / jnp.sum(e, axis=0, keepdims=True)                         # exact softmax

    # (B*S, T*B) -> (B*S, T): each column group has exactly one nonzero per row
    attn_ref[...] = jnp.dot(attn, collapse_ref[...],
                            preferred_element_type=jnp.float32)

    # context[(t*B+b), h] = sum_s attn[b,s,t] * enc[b,s,h]  (cross-batch terms are 0)
    context = lax.dot_general(attn, enc, (((0,), (0,)), ((), ())),
                              preferred_element_type=jnp.float32)        # (T*B, HP)

    # Linear over concat([dec, context]) == dec @ Wdec^T + ctx @ Wctx^T + b
    out_ref[...] = (jnp.dot(dec, wdec_ref[...], preferred_element_type=jnp.float32)
                    + jnp.dot(context, wctx_ref[...], preferred_element_type=jnp.float32)
                    + bout_ref[...])                                     # (T*B, O)


# --------------------------------------------------------------------------
# Weight-only preprocessing — run ONCE at parameter-load time, not per call.
# --------------------------------------------------------------------------
def prepare_decoder_params(params):
    O, E = params["embedding"].shape
    H = params["w_hh"].shape[1]
    assert H <= LANE, "TODO(synk): H > 128 needs a different gate-padding scheme"
    HP = LANE

    hp = lax.Precision.HIGHEST
    emb_proj = jnp.dot(params["embedding"], params["w_ih"].T, precision=hp)   # (O, 4H)
    bias = (params["b_ih"] + params["b_hh"]).reshape(1, 4 * H)
    whh_t = params["w_hh"].T                                                  # (H, 4H)

    def pad_gates(x):  # (..., 4H) -> (..., 4*HP): gate g occupies lanes [g*HP, g*HP+H)
        gs = jnp.split(x, 4, axis=-1)
        pad = [(0, 0)] * (x.ndim - 1) + [(0, HP - H)]
        return jnp.concatenate([jnp.pad(g, pad) for g in gs], axis=-1)

    return dict(
        embproj=pad_gates(emb_proj),                                          # (O, 4*HP)
        bias=pad_gates(bias),                                                 # (1, 4*HP)
        whh=jnp.pad(pad_gates(whh_t), ((0, HP - H), (0, 0))),                 # (HP, 4*HP)
        wdec=jnp.pad(params["w_out"][:, :H].T, ((0, HP - H), (0, 0))),        # (HP, O)
        wctx=jnp.pad(params["w_out"][:, H:].T, ((0, HP - H), (0, 0))),        # (HP, O)
        bout=params["b_out"].reshape(1, -1),                                  # (1, O)
        H=H, HP=HP, O=O,
    )


# --------------------------------------------------------------------------
# Per-call wrapper: tiny activation relayouts + one pallas_call
# --------------------------------------------------------------------------
def attn_decoder_forward(prep, target, last_hidden, encoder_outputs):
    if target.ndim == 1:
        target = target[None, :]                                         # (1, B)
    target = target.astype(jnp.int32)
    h0, c0 = last_hidden                                                 # each (1, B, H)

    T, B = target.shape
    S = encoder_outputs.shape[0]
    H, HP, O = prep["H"], prep["HP"], prep["O"]

    # Activation-side relayouts (tiny; constant-shaped)
    tgt2 = target.reshape(T * B, 1)                                      # row = t*B + b
    h0p = jnp.pad(h0[0], ((0, 0), (0, HP - H)))                          # (B, HP)
    c0p = jnp.pad(c0[0], ((0, 0), (0, HP - H)))                          # (B, HP)
    encp = jnp.pad(jnp.transpose(encoder_outputs, (1, 0, 2)).reshape(B * S, H),
                   ((0, 0), (0, HP - H)))                                # (B*S, HP)

    # Shape-only constants: additive batch-match mask + column-group collapse
    # (constant-fold under jit; a few tiny XLA ops otherwise).
    rb = jnp.repeat(jnp.arange(B, dtype=jnp.int32), S)                   # batch of row b*S+s
    cb = jnp.tile(jnp.arange(B, dtype=jnp.int32), T)                     # batch of col t*B+b
    amask = jnp.where(rb[:, None] == cb[None, :], 0.0, -1e30).astype(jnp.float32)
    collapse = (jnp.arange(T * B, dtype=jnp.int32)[:, None] // B
                == jnp.arange(T, dtype=jnp.int32)[None, :]).astype(jnp.float32)

    def full(shape):
        return pl.BlockSpec(shape, lambda i, _n=len(shape): (0,) * _n)

    grid_spec = pltpu.PrefetchScalarGridSpec(
        num_scalar_prefetch=0,
        grid=(1,),
        in_specs=[
            full((T * B, 1)),
            full((O, 4 * HP)),
            full((1, 4 * HP)),
            full((HP, 4 * HP)),
            full((HP, O)),
            full((HP, O)),
            full((1, O)),
            full((B, HP)),
            full((B, HP)),
            full((B * S, HP)),
            full((B * S, T * B)),
            full((T * B, T)),
        ],
        out_specs=[
            full((T * B, O)),
            full((B, HP)),
            full((B, HP)),
            full((B * S, T)),
        ],
    )

    out_flat, hT, cT, attn_flat = pl.pallas_call(
        _fused_decoder_kernel,
        grid_spec=grid_spec,
        out_shape=[
            jax.ShapeDtypeStruct((T * B, O), jnp.float32),
            jax.ShapeDtypeStruct((B, HP), jnp.float32),
            jax.ShapeDtypeStruct((B, HP), jnp.float32),
            jax.ShapeDtypeStruct((B * S, T), jnp.float32),
        ],
        compiler_params=pltpu.CompilerParams(dimension_semantics=("arbitrary",)),
    )(tgt2, prep["embproj"], prep["bias"], prep["whh"],
      prep["wdec"], prep["wctx"], prep["bout"],
      h0p, c0p, encp, amask, collapse)

    output = out_flat.reshape(T, B, O)                                   # contiguous reshape
    hidden = (hT[:, :H][None], cT[:, :H][None])                          # (1, B, H) each
    attn_w = attn_flat.reshape(B, S, T)                                  # contiguous reshape
    return output, hidden, attn_w


# --------------------------------------------------------------------------
# Deterministic parameter init (PyTorch-like layouts)
# --------------------------------------------------------------------------
def init_params(key, embedding_size, hidden_size, output_size):
    E, H, O = embedding_size, hidden_size, output_size
    ks = jax.random.split(key, 7)
    k_lstm = 1.0 / math.sqrt(H)
    k_out = 1.0 / math.sqrt(2 * H)
    return dict(
        embedding=jax.random.normal(ks[0], (O, E), jnp.float32),
        w_ih=jax.random.uniform(ks[1], (4 * H, E), jnp.float32, -k_lstm, k_lstm),
        w_hh=jax.random.uniform(ks[2], (4 * H, H), jnp.float32, -k_lstm, k_lstm),
        b_ih=jax.random.uniform(ks[3], (4 * H,), jnp.float32, -k_lstm, k_lstm),
        b_hh=jax.random.uniform(ks[4], (4 * H,), jnp.float32, -k_lstm, k_lstm),
        w_out=jax.random.uniform(ks[5], (O, 2 * H), jnp.float32, -k_out, k_out),
        b_out=jax.random.uniform(ks[6], (O,), jnp.float32, -k_out, k_out),
    )


# --------------------------------------------------------------------------
# Pure-JAX reference (numerical sanity check)
# --------------------------------------------------------------------------
def _reference_forward(params, target, last_hidden, encoder_outputs):
    hp = lax.Precision.HIGHEST
    if target.ndim == 1:
        target = target[None, :]
    h, c = last_hidden[0][0], last_hidden[1][0]
    H = h.shape[-1]
    emb = jnp.take(params["embedding"], target, axis=0)
    outs = []
    for t in range(emb.shape[0]):
        gates = (jnp.dot(emb[t], params["w_ih"].T, precision=hp)
                 + jnp.dot(h, params["w_hh"].T, precision=hp)
                 + params["b_ih"] + params["b_hh"])
        i = jax.nn.sigmoid(gates[:, :H])
        f = jax.nn.sigmoid(gates[:, H:2 * H])
        g = jnp.tanh(gates[:, 2 * H:3 * H])
        o = jax.nn.sigmoid(gates[:, 3 * H:])
        c = f * c + i * g
        h = o * jnp.tanh(c)
        outs.append(h)
    dec = jnp.stack(outs)                                                # (T, B, H)
    enc_bt = jnp.transpose(encoder_outputs, (1, 0, 2))
    dec_bt = jnp.transpose(dec, (1, 0, 2))
    scores = jnp.einsum("bsh,bth->bst", enc_bt, dec_bt, precision=hp)
    attn = jax.nn.softmax(scores, axis=1)
    context = jnp.einsum("bst,bsh->bth", attn, enc_bt, precision=hp)
    cat = jnp.concatenate([dec_bt, context], axis=-1)
    out = jnp.einsum("bti,oi->bto", cat, params["w_out"], precision=hp) + params["b_out"]
    return jnp.transpose(out, (1, 0, 2)), (h[None], c[None]), attn


# --------------------------------------------------------------------------
if __name__ == "__main__":
    E, H, O = 16, 32, 20        # embedding_size, hidden_size, output_size (vocab)
    B, T, S = 2, 4, 8           # batch, decoder seq len, encoder seq len

    key = jax.random.PRNGKey(0)
    kp, kt, kh, kc, ke = jax.random.split(key, 5)

    params = init_params(kp, E, H, O)
    prep = prepare_decoder_params(params)   # ONCE at parameter-load time

    target = jax.random.randint(kt, (T, B), 0, O, dtype=jnp.int32)
    h0 = 0.1 * jax.random.normal(kh, (1, B, H), jnp.float32)
    c0 = 0.1 * jax.random.normal(kc, (1, B, H), jnp.float32)
    encoder_outputs = 0.1 * jax.random.normal(ke, (S, B, H), jnp.float32)

    output, hidden, attn_w = jax.block_until_ready(
        attn_decoder_forward(prep, target, (h0, c0), encoder_outputs))

    # shape checks
    assert output.shape == (T, B, O)
    assert hidden[0].shape == (1, B, H) and hidden[1].shape == (1, B, H)
    assert attn_w.shape == (B, S, T)

    # numerical check vs pure-JAX reference
    ref_out, ref_hidden, ref_attn = _reference_forward(
        params, target, (h0, c0), encoder_outputs)
    assert jnp.allclose(output, ref_out, atol=1e-2, rtol=1e-2)
    assert jnp.allclose(hidden[0], ref_hidden[0], atol=1e-2, rtol=1e-2)
    assert jnp.allclose(hidden[1], ref_hidden[1], atol=1e-2, rtol=1e-2)
    assert jnp.allclose(attn_w, ref_attn, atol=1e-2, rtol=1e-2)
    # exact softmax: attention weights sum to 1 over encoder positions
    assert jnp.allclose(jnp.sum(attn_w, axis=1), 1.0, atol=1e-5)
    assert bool(jnp.all(jnp.isfinite(output)))

    print("KERNEL_OK")
</pallas_src>

<mosaic_0001>
module attributes {stable_mosaic.version = 11 : i64} {
  func.func @_fused_decoder_kernel(%arg0: i32, %arg1: memref<8x1xi32, #tpu.memory_space<vmem>>, %arg2: memref<20x512xf32, #tpu.memory_space<vmem>>, %arg3: memref<1x512xf32, #tpu.memory_space<vmem>>, %arg4: memref<128x512xf32, #tpu.memory_space<vmem>>, %arg5: memref<128x20xf32, #tpu.memory_space<vmem>>, %arg6: memref<128x20xf32, #tpu.memory_space<vmem>>, %arg7: memref<1x20xf32, #tpu.memory_space<vmem>>, %arg8: memref<2x128xf32, #tpu.memory_space<vmem>>, %arg9: memref<2x128xf32, #tpu.memory_space<vmem>>, %arg10: memref<16x128xf32, #tpu.memory_space<vmem>>, %arg11: memref<16x8xf32, #tpu.memory_space<vmem>>, %arg12: memref<8x4xf32, #tpu.memory_space<vmem>>, %arg13: memref<8x20xf32, #tpu.memory_space<vmem>>, %arg14: memref<2x128xf32, #tpu.memory_space<vmem>>, %arg15: memref<2x128xf32, #tpu.memory_space<vmem>>, %arg16: memref<16x4xf32, #tpu.memory_space<vmem>>) attributes {dimension_semantics = [#tpu.dimension_semantics<arbitrary>], iteration_bounds = array<i64: 1>, scalar_prefetch = 0 : i64, scratch_operands = 0 : i64, tpu.core_type = #tpu.core_type<tc>, window_params = [{pipeline_mode = #tpu.pipeline_mode<synchronous>, transform_indices = @transform_0, window_bounds = array<i64: 8, 1>}, {pipeline_mode = #tpu.pipeline_mode<synchronous>, transform_indices = @transform_1, window_bounds = array<i64: 20, 512>}, {pipeline_mode = #tpu.pipeline_mode<synchronous>, transform_indices = @transform_2, window_bounds = array<i64: 1, 512>}, {pipeline_mode = #tpu.pipeline_mode<synchronous>, transform_indices = @transform_3, window_bounds = array<i64: 128, 512>}, {pipeline_mode = #tpu.pipeline_mode<synchronous>, transform_indices = @transform_4, window_bounds = array<i64: 128, 20>}, {pipeline_mode = #tpu.pipeline_mode<synchronous>, transform_indices = @transform_5, window_bounds = array<i64: 128, 20>}, {pipeline_mode = #tpu.pipeline_mode<synchronous>, transform_indices = @transform_6, window_bounds = array<i64: 1, 20>}, {pipeline_mode = #tpu.pipeline_mode<synchronous>, transform_indices = @transform_7, window_bounds = array<i64: 2, 128>}, {pipeline_mode = #tpu.pipeline_mode<synchronous>, transform_indices = @transform_8, window_bounds = array<i64: 2, 128>}, {pipeline_mode = #tpu.pipeline_mode<synchronous>, transform_indices = @transform_9, window_bounds = array<i64: 16, 128>}, {pipeline_mode = #tpu.pipeline_mode<synchronous>, transform_indices = @transform_10, window_bounds = array<i64: 16, 8>}, {pipeline_mode = #tpu.pipeline_mode<synchronous>, transform_indices = @transform_11, window_bounds = array<i64: 8, 4>}, {pipeline_mode = #tpu.pipeline_mode<synchronous>, transform_indices = @transform_12, window_bounds = array<i64: 8, 20>}, {pipeline_mode = #tpu.pipeline_mode<synchronous>, transform_indices = @transform_13, window_bounds = array<i64: 2, 128>}, {pipeline_mode = #tpu.pipeline_mode<synchronous>, transform_indices = @transform_14, window_bounds = array<i64: 2, 128>}, {pipeline_mode = #tpu.pipeline_mode<synchronous>, transform_indices = @transform_15, window_bounds = array<i64: 16, 4>}]} {
    %0 = tpu.iota {dimensions = array<i32: 1>} : vector<8x20xi32>
    %c0 = arith.constant 0 : index
    %c0_0 = arith.constant 0 : index
    %1 = vector.load %arg1[%c0, %c0_0] : memref<8x1xi32, #tpu.memory_space<vmem>>, vector<8x1xi32>
    %2 = vector.broadcast %1 : vector<8x1xi32> to vector<8x20xi32>
    %3 = arith.cmpi eq, %2, %0 : vector<8x20xi32>
    %4 = arith.extui %3 : vector<8x20xi1> to vector<8x20xi32>
    %5 = arith.sitofp %4 : vector<8x20xi32> to vector<8x20xf32>
    %c0_1 = arith.constant 0 : index
    %c0_2 = arith.constant 0 : index
    %6 = vector.load %arg2[%c0_1, %c0_2] : memref<20x512xf32, #tpu.memory_space<vmem>>, vector<20x512xf32>
    %cst = arith.constant dense<0.000000e+00> : vector<8x512xf32>
    %7 = tpu.matmul %5, %6, %cst {dimension_numbers = #tpu.dot_dimension_numbers<[1], [0], [0], [1], [0, 0, 1, 1], [], []>} : vector<8x20xf32>, vector<20x512xf32>, vector<8x512xf32> -> vector<8x512xf32>
    %c0_3 = arith.constant 0 : index
    %c0_4 = arith.constant 0 : index
    %8 = vector.load %arg3[%c0_3, %c0_4] : memref<1x512xf32, #tpu.memory_space<vmem>>, vector<1x512xf32>
    %9 = vector.broadcast %8 : vector<1x512xf32> to vector<8x512xf32>
    %10 = arith.addf %7, %9 : vector<8x512xf32>
    %c0_5 = arith.constant 0 : index
    %c0_6 = arith.constant 0 : index
    %11 = vector.load %arg4[%c0_5, %c0_6] : memref<128x512xf32, #tpu.memory_space<vmem>>, vector<128x512xf32>
    %c0_7 = arith.constant 0 : index
    %c0_8 = arith.constant 0 : index
    %12 = vector.load %arg8[%c0_7, %c0_8] : memref<2x128xf32, #tpu.memory_space<vmem>>, vector<2x128xf32>
    %c0_9 = arith.constant 0 : index
    %c0_10 = arith.constant 0 : index
    %13 = vector.load %arg9[%c0_9, %c0_10] : memref<2x128xf32, #tpu.memory_space<vmem>>, vector<2x128xf32>
    %14 = vector.extract_strided_slice %10 {offsets = [0, 0], sizes = [2, 512], strides = [1, 1]} : vector<8x512xf32> to vector<2x512xf32>
    %cst_11 = arith.constant dense<0.000000e+00> : vector<2x512xf32>
    %15 = tpu.matmul %12, %11, %cst_11 {dimension_numbers = #tpu.dot_dimension_numbers<[1], [0], [0], [1], [0, 0, 1, 1], [], []>} : vector<2x128xf32>, vector<128x512xf32>, vector<2x512xf32> -> vector<2x512xf32>
    %16 = arith.addf %14, %15 : vector<2x512xf32>
    %17 = arith.negf %16 : vector<2x512xf32>
    %18 = math.exp %17 : vector<2x512xf32>
    %cst_12 = arith.constant 1.000000e+00 : f32
    %19 = vector.broadcast %cst_12 : f32 to vector<2x512xf32>
    %20 = arith.addf %19, %18 : vector<2x512xf32>
    %21 = arith.divf %19, %20 : vector<2x512xf32>
    %22 = math.tanh %16 : vector<2x512xf32>
    %23 = vector.extract_strided_slice %21 {offsets = [0, 0], sizes = [2, 128], strides = [1, 1]} : vector<2x512xf32> to vector<2x128xf32>
    %24 = vector.extract_strided_slice %21 {offsets = [0, 128], sizes = [2, 128], strides = [1, 1]} : vector<2x512xf32> to vector<2x128xf32>
    %25 = vector.extract_strided_slice %22 {offsets = [0, 256], sizes = [2, 128], strides = [1, 1]} : vector<2x512xf32> to vector<2x128xf32>
    %26 = vector.extract_strided_slice %21 {offsets = [0, 384], sizes = [2, 128], strides = [1, 1]} : vector<2x512xf32> to vector<2x128xf32>
    %27 = arith.mulf %24, %13 : vector<2x128xf32>
    %28 = arith.mulf %23, %25 : vector<2x128xf32>
    %29 = arith.addf %27, %28 : vector<2x128xf32>
    %30 = math.tanh %29 : vector<2x128xf32>
    %31 = arith.mulf %26, %30 : vector<2x128xf32>
    %32 = vector.extract_strided_slice %10 {offsets = [2, 0], sizes = [2, 512], strides = [1, 1]} : vector<8x512xf32> to vector<2x512xf32>
    %cst_13 = arith.constant dense<0.000000e+00> : vector<2x512xf32>
    %33 = tpu.matmul %31, %11, %cst_13 {dimension_numbers = #tpu.dot_dimension_numbers<[1], [0], [0], [1], [0, 0, 1, 1], [], []>} : vector<2x128xf32>, vector<128x512xf32>, vector<2x512xf32> -> vector<2x512xf32>
    %34 = arith.addf %32, %33 : vector<2x512xf32>
    %35 = arith.negf %34 : vector<2x512xf32>
    %36 = math.exp %35 : vector<2x512xf32>
    %cst_14 = arith.constant 1.000000e+00 : f32
    %37 = vector.broadcast %cst_14 : f32 to vector<2x512xf32>
    %38 = arith.addf %37, %36 : vector<2x512xf32>
    %39 = arith.divf %37, %38 : vector<2x512xf32>
    %40 = math.tanh %34 : vector<2x512xf32>
    %41 = vector.extract_strided_slice %39 {offsets = [0, 0], sizes = [2, 128], strides = [1, 1]} : vector<2x512xf32> to vector<2x128xf32>
    %42 = vector.extract_strided_slice %39 {offsets = [0, 128], sizes = [2, 128], strides = [1, 1]} : vector<2x512xf32> to vector<2x128xf32>
    %43 = vector.extract_strided_slice %40 {offsets = [0, 256], sizes = [2, 128], strides = [1, 1]} : vector<2x512xf32> to vector<2x128xf32>
    %44 = vector.extract_strided_slice %39 {offsets = [0, 384], sizes = [2, 128], strides = [1, 1]} : vector<2x512xf32> to vector<2x128xf32>
    %45 = arith.mulf %42, %29 : vector<2x128xf32>
    %46 = arith.mulf %41, %43 : vector<2x128xf32>
    %47 = arith.addf %45, %46 : vector<2x128xf32>
    %48 = math.tanh %47 : vector<2x128xf32>
    %49 = arith.mulf %44, %48 : vector<2x128xf32>
    %50 = vector.extract_strided_slice %10 {offsets = [4, 0], sizes = [2, 512], strides = [1, 1]} : vector<8x512xf32> to vector<2x512xf32>
    %cst_15 = arith.constant dense<0.000000e+00> : vector<2x512xf32>
    %51 = tpu.matmul %49, %11, %cst_15 {dimension_numbers = #tpu.dot_dimension_numbers<[1], [0], [0], [1], [0, 0, 1, 1], [], []>} : vector<2x128xf32>, vector<128x512xf32>, vector<2x512xf32> -> vector<2x512xf32>
    %52 = arith.addf %50, %51 : vector<2x512xf32>
    %53 = arith.negf %52 : vector<2x512xf32>
    %54 = math.exp %53 : vector<2x512xf32>
    %cst_16 = arith.constant 1.000000e+00 : f32
    %55 = vector.broadcast %cst_16 : f32 to vector<2x512xf32>
    %56 = arith.addf %55, %54 : vector<2x512xf32>
    %57 = arith.divf %55, %56 : vector<2x512xf32>
    %58 = math.tanh %52 : vector<2x512xf32>
    %59 = vector.extract_strided_slice %57 {offsets = [0, 0], sizes = [2, 128], strides = [1, 1]} : vector<2x512xf32> to vector<2x128xf32>
    %60 = vector.extract_strided_slice %57 {offsets = [0, 128], sizes = [2, 128], strides = [1, 1]} : vector<2x512xf32> to vector<2x128xf32>
    %61 = vector.extract_strided_slice %58 {offsets = [0, 256], sizes = [2, 128], strides = [1, 1]} : vector<2x512xf32> to vector<2x128xf32>
    %62 = vector.extract_strided_slice %57 {offsets = [0, 384], sizes = [2, 128], strides = [1, 1]} : vector<2x512xf32> to vector<2x128xf32>
    %63 = arith.mulf %60, %47 : vector<2x128xf32>
    %64 = arith.mulf %59, %61 : vector<2x128xf32>
    %65 = arith.addf %63, %64 : vector<2x128xf32>
    %66 = math.tanh %65 : vector<2x128xf32>
    %67 = arith.mulf %62, %66 : vector<2x128xf32>
    %68 = vector.extract_strided_slice %10 {offsets = [6, 0], sizes = [2, 512], strides = [1, 1]} : vector<8x512xf32> to vector<2x512xf32>
    %cst_17 = arith.constant dense<0.000000e+00> : vector<2x512xf32>
    %69 = tpu.matmul %67, %11, %cst_17 {dimension_numbers = #tpu.dot_dimension_numbers<[1], [0], [0], [1], [0, 0, 1, 1], [], []>} : vector<2x128xf32>, vector<128x512xf32>, vector<2x512xf32> -> vector<2x512xf32>
    %70 = arith.addf %68, %69 : vector<2x512xf32>
    %71 = arith.negf %70 : vector<2x512xf32>
    %72 = math.exp %71 : vector<2x512xf32>
    %cst_18 = arith.constant 1.000000e+00 : f32
    %73 = vector.broadcast %cst_18 : f32 to vector<2x512xf32>
    %74 = arith.addf %73, %72 : vector<2x512xf32>
    %75 = arith.divf %73, %74 : vector<2x512xf32>
    %76 = math.tanh %70 : vector<2x512xf32>
    %77 = vector.extract_strided_slice %75 {offsets = [0, 0], sizes = [2, 128], strides = [1, 1]} : vector<2x512xf32> to vector<2x128xf32>
    %78 = vector.extract_strided_slice %75 {offsets = [0, 128], sizes = [2, 128], strides = [1, 1]} : vector<2x512xf32> to vector<2x128xf32>
    %79 = vector.extract_strided_slice %76 {offsets = [0, 256], sizes = [2, 128], strides = [1, 1]} : vector<2x512xf32> to vector<2x128xf32>
    %80 = vector.extract_strided_slice %75 {offsets = [0, 384], sizes = [2, 128], strides = [1, 1]} : vector<2x512xf32> to vector<2x128xf32>
    %81 = arith.mulf %78, %65 : vector<2x128xf32>
    %82 = arith.mulf %77, %79 : vector<2x128xf32>
    %83 = arith.addf %81, %82 : vector<2x128xf32>
    %84 = math.tanh %83 : vector<2x128xf32>
    %85 = arith.mulf %80, %84 : vector<2x128xf32>
    %c0_19 = arith.constant 0 : index
    %c0_20 = arith.constant 0 : index
    %86 = vector.load %arg14[%c0_19, %c0_20] : memref<2x128xf32, #tpu.memory_space<vmem>>, vector<2x128xf32>
    tpu.vector_store %arg14[%c0_19, %c0_20], %85 {strides = array<i32>} : memref<2x128xf32, #tpu.memory_space<vmem>>, vector<2x128xf32>,
    %c0_21 = arith.constant 0 : index
    %c0_22 = arith.constant 0 : index
    %87 = vector.load %arg15[%c0_21, %c0_22] : memref<2x128xf32, #tpu.memory_space<vmem>>, vector<2x128xf32>
    tpu.vector_store %arg15[%c0_21, %c0_22], %83 {strides = array<i32>} : memref<2x128xf32, #tpu.memory_space<vmem>>, vector<2x128xf32>,
    %88 = tpu.concatenate %31, %49, %67, %85 in 0 : vector<2x128xf32>, vector<2x128xf32>, vector<2x128xf32>, vector<2x128xf32> -> vector<8x128xf32>
    %c0_23 = arith.constant 0 : index
    %c0_24 = arith.constant 0 : index
    %89 = vector.load %arg10[%c0_23, %c0_24] : memref<16x128xf32, #tpu.memory_space<vmem>>, vector<16x128xf32>
    %cst_25 = arith.constant dense<0.000000e+00> : vector<16x8xf32>
    %90 = tpu.matmul %89, %88, %cst_25 {dimension_numbers = #tpu.dot_dimension_numbers<[1], [1], [0], [0], [0, 0, 1, 0], [], []>} : vector<16x128xf32>, vector<8x128xf32>, vector<16x8xf32> -> vector<16x8xf32>
    %c0_26 = arith.constant 0 : index
    %c0_27 = arith.constant 0 : index
    %91 = vector.load %arg11[%c0_26, %c0_27] : memref<16x8xf32, #tpu.memory_space<vmem>>, vector<16x8xf32>
    %92 = arith.addf %90, %91 : vector<16x8xf32>
    %cst_28 = arith.constant dense<0xFF800000> : vector<8xf32>
    %93 = vector.multi_reduction <maximumf>, %92, %cst_28 [0] : vector<16x8xf32> to vector<8xf32>
    %94 = vector.shape_cast %93 : vector<8xf32> to vector<1x8xf32>
    %95 = vector.broadcast %94 : vector<1x8xf32> to vector<16x8xf32>
    %96 = arith.subf %92, %95 : vector<16x8xf32>
    %97 = math.exp %96 : vector<16x8xf32>
    %cst_29 = arith.constant dense<0.000000e+00> : vector<8xf32>
    %98 = vector.multi_reduction <add>, %97, %cst_29 [0] : vector<16x8xf32> to vector<8xf32>
    %99 = vector.shape_cast %98 : vector<8xf32> to vector<1x8xf32>
    %100 = vector.broadcast %99 : vector<1x8xf32> to vector<16x8xf32>
    %101 = arith.divf %97, %100 : vector<16x8xf32>
    %c0_30 = arith.constant 0 : index
    %c0_31 = arith.constant 0 : index
    %102 = vector.load %arg12[%c0_30, %c0_31] : memref<8x4xf32, #tpu.memory_space<vmem>>, vector<8x4xf32>
    %cst_32 = arith.constant dense<0.000000e+00> : vector<16x4xf32>
    %103 = tpu.matmul %101, %102, %cst_32 {dimension_numbers = #tpu.dot_dimension_numbers<[1], [0], [0], [1], [0, 0, 1, 1], [], []>} : vector<16x8xf32>, vector<8x4xf32>, vector<16x4xf32> -> vector<16x4xf32>
    %c0_33 = arith.constant 0 : index
    %c0_34 = arith.constant 0 : index
    %104 = vector.load %arg16[%c0_33, %c0_34] : memref<16x4xf32, #tpu.memory_space<vmem>>, vector<16x4xf32>
    tpu.vector_store %arg16[%c0_33, %c0_34], %103 {strides = array<i32>} : memref<16x4xf32, #tpu.memory_space<vmem>>, vector<16x4xf32>,
    %cst_35 = arith.constant dense<0.000000e+00> : vector<8x128xf32>
    %105 = tpu.matmul %101, %89, %cst_35 {dimension_numbers = #tpu.dot_dimension_numbers<[0], [0], [1], [1], [0, 1, 1, 1], [], []>} : vector<16x8xf32>, vector<16x128xf32>, vector<8x128xf32> -> vector<8x128xf32>
    %c0_36 = arith.constant 0 : index
    %c0_37 = arith.constant 0 : index
    %106 = vector.load %arg5[%c0_36, %c0_37] : memref<128x20xf32, #tpu.memory_space<vmem>>, vector<128x20xf32>
    %cst_38 = arith.constant dense<0.000000e+00> : vector<8x20xf32>
    %107 = tpu.matmul %88, %106, %cst_38 {dimension_numbers = #tpu.dot_dimension_numbers<[1], [0], [0], [1], [0, 0, 1, 1], [], []>} : vector<8x128xf32>, vector<128x20xf32>, vector<8x20xf32> -> vector<8x20xf32>
    %c0_39 = arith.constant 0 : index
    %c0_40 = arith.constant 0 : index
    %108 = vector.load %arg6[%c0_39, %c0_40] : memref<128x20xf32, #tpu.memory_space<vmem>>, vector<128x20xf32>
    %cst_41 = arith.constant dense<0.000000e+00> : vector<8x20xf32>
    %109 = tpu.matmul %105, %108, %cst_41 {dimension_numbers = #tpu.dot_dimension_numbers<[1], [0], [0], [1], [0, 0, 1, 1], [], []>} : vector<8x128xf32>, vector<128x20xf32>, vector<8x20xf32> -> vector<8x20xf32>
    %110 = arith.addf %107, %109 : vector<8x20xf32>
    %c0_42 = arith.constant 0 : index
    %c0_43 = arith.constant 0 : index
    %111 = vector.load %arg7[%c0_42, %c0_43] : memref<1x20xf32, #tpu.memory_space<vmem>>, vector<1x20xf32>
    %112 = vector.broadcast %111 : vector<1x20xf32> to vector<8x20xf32>
    %113 = arith.addf %110, %112 : vector<8x20xf32>
    %c0_44 = arith.constant 0 : index
    %c0_45 = arith.constant 0 : index
    %114 = vector.load %arg13[%c0_44, %c0_45] : memref<8x20xf32, #tpu.memory_space<vmem>>, vector<8x20xf32>
    tpu.vector_store %arg13[%c0_44, %c0_45], %113 {strides = array<i32>} : memref<8x20xf32, #tpu.memory_space<vmem>>, vector<8x20xf32>,
    return
  }
  func.func @transform_0(%arg0: i32) -> (i32, i32) {
    %c0_i32 = arith.constant 0 : i32
    %c0_i32_0 = arith.constant 0 : i32
    %c0_i32_1 = arith.constant 0 : i32
    return %c0_i32, %c0_i32_0 : i32, i32
  }
  func.func @transform_1(%arg0: i32) -> (i32, i32) {
    %c0_i32 = arith.constant 0 : i32
    %c0_i32_0 = arith.constant 0 : i32
    %c0_i32_1 = arith.constant 0 : i32
    return %c0_i32, %c0_i32_0 : i32, i32
  }
  func.func @transform_2(%arg0: i32) -> (i32, i32) {
    %c0_i32 = arith.constant 0 : i32
    %c0_i32_0 = arith.constant 0 : i32
    %c0_i32_1 = arith.constant 0 : i32
    return %c0_i32, %c0_i32_0 : i32, i32
  }
  func.func @transform_3(%arg0: i32) -> (i32, i32) {
    %c0_i32 = arith.constant 0 : i32
    %c0_i32_0 = arith.constant 0 : i32
    %c0_i32_1 = arith.constant 0 : i32
    return %c0_i32, %c0_i32_0 : i32, i32
  }
  func.func @transform_4(%arg0: i32) -> (i32, i32) {
    %c0_i32 = arith.constant 0 : i32
    %c0_i32_0 = arith.constant 0 : i32
    %c0_i32_1 = arith.constant 0 : i32
    return %c0_i32, %c0_i32_0 : i32, i32
  }
  func.func @transform_5(%arg0: i32) -> (i32, i32) {
    %c0_i32 = arith.constant 0 : i32
    %c0_i32_0 = arith.constant 0 : i32
    %c0_i32_1 = arith.constant 0 : i32
    return %c0_i32, %c0_i32_0 : i32, i32
  }
  func.func @transform_6(%arg0: i32) -> (i32, i32) {
    %c0_i32 = arith.constant 0 : i32
    %c0_i32_0 = arith.constant 0 : i32
    %c0_i32_1 = arith.constant 0 : i32
    return %c0_i32, %c0_i32_0 : i32, i32
  }
  func.func @transform_7(%arg0: i32) -> (i32, i32) {
    %c0_i32 = arith.constant 0 : i32
    %c0_i32_0 = arith.constant 0 : i32
    %c0_i32_1 = arith.constant 0 : i32
    return %c0_i32, %c0_i32_0 : i32, i32
  }
  func.func @transform_8(%arg0: i32) -> (i32, i32) {
    %c0_i32 = arith.constant 0 : i32
    %c0_i32_0 = arith.constant 0 : i32
    %c0_i32_1 = arith.constant 0 : i32
    return %c0_i32, %c0_i32_0 : i32, i32
  }
  func.func @transform_9(%arg0: i32) -> (i32, i32) {
    %c0_i32 = arith.constant 0 : i32
    %c0_i32_0 = arith.constant 0 : i32
    %c0_i32_1 = arith.constant 0 : i32
    return %c0_i32, %c0_i32_0 : i32, i32
  }
  func.func @transform_10(%arg0: i32) -> (i32, i32) {
    %c0_i32 = arith.constant 0 : i32
    %c0_i32_0 = arith.constant 0 : i32
    %c0_i32_1 = arith.constant 0 : i32
    return %c0_i32, %c0_i32_0 : i32, i32
  }
  func.func @transform_11(%arg0: i32) -> (i32, i32) {
    %c0_i32 = arith.constant 0 : i32
    %c0_i32_0 = arith.constant 0 : i32
    %c0_i32_1 = arith.constant 0 : i32
    return %c0_i32, %c0_i32_0 : i32, i32
  }
  func.func @transform_12(%arg0: i32) -> (i32, i32) {
    %c0_i32 = arith.constant 0 : i32
    %c0_i32_0 = arith.constant 0 : i32
    %c0_i32_1 = arith.constant 0 : i32
    return %c0_i32, %c0_i32_0 : i32, i32
  }
  func.func @transform_13(%arg0: i32) -> (i32, i32) {
    %c0_i32 = arith.constant 0 : i32
    %c0_i32_0 = arith.constant 0 : i32
    %c0_i32_1 = arith.constant 0 : i32
    return %c0_i32, %c0_i32_0 : i32, i32
  }
  func.func @transform_14(%arg0: i32) -> (i32, i32) {
    %c0_i32 = arith.constant 0 : i32
    %c0_i32_0 = arith.constant 0 : i32
    %c0_i32_1 = arith.constant 0 : i32
    return %c0_i32, %c0_i32_0 : i32, i32
  }
  func.func @transform_15(%arg0: i32) -> (i32, i32) {
    %c0_i32 = arith.constant 0 : i32
    %c0_i32_0 = arith.constant 0 : i32
    %c0_i32_1 = arith.constant 0 : i32
    return %c0_i32, %c0_i32_0 : i32, i32
  }
}

</mosaic_0001>

<llo_original>
// kernel: tpu_custom_call.1
$region0: #{tpu_custom_call.1}
  #allocation0 [shape = 'u32[]', space=smem, size = 0x4, offset = 0x4, fixed_abs, tag = 'smem constant byte address 0x4 - core index']
  #allocation1 [shape = 'u32[72,128]{1,0:T(1,128)}', space=vmem, size = 0x9000, scoped, tag = 'internal scratch']
  %s0 = inlined_call_operand.vmem [shape: s32[8,1], index: 0, kind: input, shape index: {}]
  %s1 = inlined_call_operand.vmem [shape: f32[20,512], index: 1, kind: input, shape index: {}]
  %s2 = inlined_call_operand.vmem [shape: f32[1,512], index: 2, kind: input, shape index: {}]
  %s3 = inlined_call_operand.hbm [shape: f32[128,512], index: 3, kind: input, shape index: {}]
  %s4 = inlined_call_operand.vmem [shape: f32[128,20], index: 4, kind: input, shape index: {}]
  %s5 = inlined_call_operand.vmem [shape: f32[128,20], index: 5, kind: input, shape index: {}]
  %s6 = inlined_call_operand.vmem [shape: f32[1,20], index: 6, kind: input, shape index: {}]
  %s7 = inlined_call_operand.vmem [shape: f32[2,128], index: 7, kind: input, shape index: {}]
  %s8 = inlined_call_operand.vmem [shape: f32[2,128], index: 8, kind: input, shape index: {}]
  %s9 = inlined_call_operand.vmem [shape: f32[16,128], index: 9, kind: input, shape index: {}]
  %s10 = inlined_call_operand.vmem [shape: f32[16,8], index: 10, kind: input, shape index: {}]
  %s11 = inlined_call_operand.vmem [shape: f32[8,4], index: 11, kind: input, shape index: {}]
  %s12 = inlined_call_operand.hbm [shape: f32[8,20], index: 12, kind: output, shape index: {0}]
  %s13 = inlined_call_operand.hbm [shape: f32[2,128], index: 13, kind: output, shape index: {1}]
  %s14 = inlined_call_operand.hbm [shape: f32[2,128], index: 14, kind: output, shape index: {2}]
  %s15 = inlined_call_operand.vmem [shape: f32[16,4], index: 15, kind: output, shape index: {3}]
  %16 = xla_tuple %s12, %s13, %s14, %s15
  %s17 = sld [smem:[#allocation0]]
  $region86: #{tpu_custom_call.1} parent=0
    _
  %s19 = ssub.s32 1, %s17
  %s20 = scalar_select 0, %s19, %s17
  $region1: #{tpu_custom_call.1} parent=0
    #allocation2 [shape = 'u8[262144]{0}', space=vmem, size = 0x40000, scoped, tag = 'input window, operand 3, single buffered']
    #allocation3 [shape = 's32[1]{0}', space=sflag, size = 0x4, scoped, tag = 'scoped memory for tpu_custom_call.1']
    #allocation4 [shape = 's32[1]{0}', space=sflag, size = 0x4, scoped, tag = 'scoped memory for tpu_custom_call.1']
    #allocation5 [shape = 'u8[4096]{0}', space=vmem, size = 0x1000, scoped, tag = 'output window, operand 0, single buffered']
    #allocation6 [shape = 'u8[1024]{0}', space=vmem, size = 0x400, scoped, tag = 'output window, operand 1, single buffered']
    #allocation7 [shape = 's32[1]{0}', space=sflag, size = 0x4, scoped, tag = 'scoped memory for tpu_custom_call.1']
    #allocation8 [shape = 'u8[1024]{0}', space=vmem, size = 0x400, scoped, tag = 'output window, operand 2, single buffered']
    %21 = vsyncpa [#allocation3], 0
    %22 = vsyncpa [#allocation4], 0
    %23 = vsyncpa [#allocation7], 0
    // Predicated region
    $region2: #{tpu_custom_call.1} parent=1 // pred_check
      _
    $region3: #{tpu_custom_call.1} parent=1 // pred_check_branch
      %25 = sbr.rel (0) target = $region5
    $region4: #{tpu_custom_call.1} parent=1 // pred_region
      _
    $region5: #{tpu_custom_call.1} parent=1 // pred_fallthru
      _
    // Predicated region
    $region6: #{tpu_custom_call.1} parent=1 // pred_check
      _
    $region7: #{tpu_custom_call.1} parent=1 // pred_check_branch
      %27 = sbr.rel (0) target = $region9
    $region8: #{tpu_custom_call.1} parent=1 // pred_region
      _
    $region9: #{tpu_custom_call.1} parent=1 // pred_fallthru
      _
    // Predicated region
    $region10: #{tpu_custom_call.1} parent=1 // pred_check
      _
    $region11: #{tpu_custom_call.1} parent=1 // pred_check_branch
      %29 = sbr.rel (0) target = $region13
    $region12: #{tpu_custom_call.1} parent=1 // pred_region
      _
    $region13: #{tpu_custom_call.1} parent=1 // pred_fallthru
      _
    // Predicated region
    $region14: #{tpu_custom_call.1} parent=1 // pred_check
      _
    $region15: #{tpu_custom_call.1} parent=1 // pred_check_branch
      %31 = sbr.rel (0) target = $region17
    $region16: #{tpu_custom_call.1} parent=1 // pred_region
      %33 = vsyncadd [#allocation3], 0
      %s34 = sshll.u32 %s3, 4
      %s35 = int_to_ptr.hbm [resolvable:$true] %s34
      %s36 = sshll.u32 [#allocation2], 4
      %s37 = int_to_ptr.vmem [resolvable:$true] %s36
      %42 = dma.hbm_to_vmem [thread:$0]  %s35, 8192, %s37, [#allocation3], 512, 512, 32
    $region17: #{tpu_custom_call.1} parent=1 // pred_fallthru
      _
    // Predicated region
    $region18: #{tpu_custom_call.1} parent=1 // pred_check
      _
    $region19: #{tpu_custom_call.1} parent=1 // pred_check_branch
      %44 = sbr.rel (0) target = $region21
    $region20: #{tpu_custom_call.1} parent=1 // pred_region
      _
    $region21: #{tpu_custom_call.1} parent=1 // pred_fallthru
      _
    // Predicated region
    $region22: #{tpu_custom_call.1} parent=1 // pred_check
      _
    $region23: #{tpu_custom_call.1} parent=1 // pred_check_branch
      %46 = sbr.rel (0) target = $region25
    $region24: #{tpu_custom_call.1} parent=1 // pred_region
      _
    $region25: #{tpu_custom_call.1} parent=1 // pred_fallthru
      _
    // Predicated region
    $region26: #{tpu_custom_call.1} parent=1 // pred_check
      _
    $region27: #{tpu_custom_call.1} parent=1 // pred_check_branch
      %48 = sbr.rel (0) target = $region29
    $region28: #{tpu_custom_call.1} parent=1 // pred_region
      _
    $region29: #{tpu_custom_call.1} parent=1 // pred_fallthru
      _
    // Predicated region
    $region30: #{tpu_custom_call.1} parent=1 // pred_check
      _
    $region31: #{tpu_custom_call.1} parent=1 // pred_check_branch
      %50 = sbr.rel (0) target = $region33
    $region32: #{tpu_custom_call.1} parent=1 // pred_region
      _
    $region33: #{tpu_custom_call.1} parent=1 // pred_fallthru
      _
    // Predicated region
    $region34: #{tpu_custom_call.1} parent=1 // pred_check
      _
    $region35: #{tpu_custom_call.1} parent=1 // pred_check_branch
      %52 = sbr.rel (0) target = $region37
    $region36: #{tpu_custom_call.1} parent=1 // pred_region
      _
    $region37: #{tpu_custom_call.1} parent=1 // pred_fallthru
      _
    // Predicated region
    $region38: #{tpu_custom_call.1} parent=1 // pred_check
      _
    $region39: #{tpu_custom_call.1} parent=1 // pred_check_branch
      %54 = sbr.rel (0) target = $region41
    $region40: #{tpu_custom_call.1} parent=1 // pred_region
      _
    $region41: #{tpu_custom_call.1} parent=1 // pred_fallthru
      _
    // Predicated region
    $region42: #{tpu_custom_call.1} parent=1 // pred_check
      _
    $region43: #{tpu_custom_call.1} parent=1 // pred_check_branch
      %56 = sbr.rel (0) target = $region45
    $region44: #{tpu_custom_call.1} parent=1 // pred_region
      _
    $region45: #{tpu_custom_call.1} parent=1 // pred_fallthru
      _
    // Predicated region
    $region46: #{tpu_custom_call.1} parent=1 // pred_check
      _
    $region47: #{tpu_custom_call.1} parent=1 // pred_check_branch
      %58 = sbr.rel (0) target = $region49
    $region48: #{tpu_custom_call.1} parent=1 // pred_region
      _
    $region49: #{tpu_custom_call.1} parent=1 // pred_fallthru
      _
    // Predicated region
    $region50: #{tpu_custom_call.1} parent=1 // pred_check
      _
    $region51: #{tpu_custom_call.1} parent=1 // pred_check_branch
      %60 = sbr.rel (0) target = $region53
    $region52: #{tpu_custom_call.1} parent=1 // pred_region
      %62 = dma.done [#allocation3], 8192
    $region53: #{tpu_custom_call.1} parent=1 // pred_fallthru
      _
    %v63 = vlaneseq
    %v64 = vand.u32 %v63, 127
    %v65 = vld [vmem:[%s0] sm:$0xff]
    %66 = vset.pattern.permute.xlu0 0
    %67 = vperm.xlu0 %66, %v65
    %v68 = vpop.permute.xlu0 %67
    %vm69 = vcmp.eq.s32.totalorder %v68, %v64
    %v70 = vsel %vm69, 1, 0
    %v71 = vcvt.s32.f32 %v70
    %v72 = vld [vmem:[%s1] sm:$0xff]
    %v73 = vld [vmem:[%s1 + $0x8] sm:$0xff]
    %v74 = vld [vmem:[%s1 + $0x10] sm:$0xff]
    %v75 = vld [vmem:[%s1 + $0x18] sm:$0xff]
    %v76 = vld [vmem:[%s1 + $0x20] sm:$0xff]
    %v77 = vld [vmem:[%s1 + $0x28] sm:$0xff]
    %v78 = vld [vmem:[%s1 + $0x30] sm:$0xff]
    %v79 = vld [vmem:[%s1 + $0x38] sm:$0xff]
    %v80 = vld [vmem:[%s1 + $0x40] sm:$0xf]
    %v81 = vld [vmem:[%s1 + $0x48] sm:$0xf]
    %v82 = vld [vmem:[%s1 + $0x50] sm:$0xf]
    %v83 = vld [vmem:[%s1 + $0x58] sm:$0xf]
    %v84 = vld [vmem:[%s2] sm:$0xf]
    %v86 = vperm.slane %v84, 0
    %v87 = vperm.slane %v84, 1
    %v88 = vperm.slane %v84, 2
    %v89 = vperm.slane %v84, 3
    %vm94 = vcmask 162816
    %v96 = vsel %vm94, %v71, 0
    %vm98 = vcmask 1043456
    %v100 = vsel %vm98, %v80, 0
    %v103 = vsel %vm98, %v81, 0
    %v106 = vsel %vm98, %v82, 0
    %v109 = vsel %vm98, %v83, 0
    %111 = vmatpush.msra.mxu0 0.0
    %112 = vmatpush.msra.mxu0 0.0
    %113 = vmatpush.msra.mxu0 0.0
    %114 = vmatpush.msra.mxu0 0.0
    %115 = vmatpush.msra.mxu0 0.0
    %116 = vmatpush.msra.mxu0 0.0
    %117 = vmatpush.msra.mxu0 0.0
    %118 = vmatpush.msra.mxu0 0.0
    %119 = vmatpush.msra.mxu0 0.0
    %120 = vmatpush.msra.mxu0 0.0
    %121 = vmatpush.msra.mxu0 0.0
    %122 = vmatpush.msra.mxu0 0.0
    %123 = vmatpush.msra.mxu0 0.0
    %124 = vmatpush.msra.mxu0 %v100
    %125 = vmatpush.msra.mxu0 %v76
    %126 = vmatpush.msra.mxu0 %v72
    %127 = vmatmul.f32.gmra.mxu0 %v96
    %v128 = vpop.f32.mrf.mxu0
    %v129 = vadd.f32 %v86, %v128
    %130 = vdwg.mxu0
    %131 = vmatpush.msra.mxu0 0.0
    %132 = vmatpush.msra.mxu0 0.0
    %133 = vmatpush.msra.mxu0 0.0
    %134 = vmatpush.msra.mxu0 0.0
    %135 = vmatpush.msra.mxu0 0.0
    %136 = vmatpush.msra.mxu0 0.0
    %137 = vmatpush.msra.mxu0 0.0
    %138 = vmatpush.msra.mxu0 0.0
    %139 = vmatpush.msra.mxu0 0.0
    %140 = vmatpush.msra.mxu0 0.0
    %141 = vmatpush.msra.mxu0 0.0
    %142 = vmatpush.msra.mxu0 0.0
    %143 = vmatpush.msra.mxu0 0.0
    %144 = vmatpush.msra.mxu0 %v103
    %145 = vmatpush.msra.mxu0 %v77
    %146 = vmatpush.msra.mxu0 %v73
    %147 = vmatmul.f32.gmra.mxu0 %v96
    %v148 = vpop.f32.mrf.mxu0
    %v149 = vadd.f32 %v87, %v148
    %150 = vdwg.mxu0
    %151 = vmatpush.msra.mxu0 0.0
    %152 = vmatpush.msra.mxu0 0.0
    %153 = vmatpush.msra.mxu0 0.0
    %154 = vmatpush.msra.mxu0 0.0
    %155 = vmatpush.msra.mxu0 0.0
    %156 = vmatpush.msra.mxu0 0.0
    %157 = vmatpush.msra.mxu0 0.0
    %158 = vmatpush.msra.mxu0 0.0
    %159 = vmatpush.msra.mxu0 0.0
    %160 = vmatpush.msra.mxu0 0.0
    %161 = vmatpush.msra.mxu0 0.0
    %162 = vmatpush.msra.mxu0 0.0
    %163 = vmatpush.msra.mxu0 0.0
    %164 = vmatpush.msra.mxu0 %v106
    %165 = vmatpush.msra.mxu0 %v78
    %166 = vmatpush.msra.mxu0 %v74
    %167 = vmatmul.f32.gmra.mxu0 %v96
    %v168 = vpop.f32.mrf.mxu0
    %v169 = vadd.f32 %v88, %v168
    %170 = vdwg.mxu0
    %171 = vmatpush.msra.mxu0 0.0
    %172 = vmatpush.msra.mxu0 0.0
    %173 = vmatpush.msra.mxu0 0.0
    %174 = vmatpush.msra.mxu0 0.0
    %175 = vmatpush.msra.mxu0 0.0
    %176 = vmatpush.msra.mxu0 0.0
    %177 = vmatpush.msra.mxu0 0.0
    %178 = vmatpush.msra.mxu0 0.0
    %179 = vmatpush.msra.mxu0 0.0
    %180 = vmatpush.msra.mxu0 0.0
    %181 = vmatpush.msra.mxu0 0.0
    %182 = vmatpush.msra.mxu0 0.0
    %183 = vmatpush.msra.mxu0 0.0
    %184 = vmatpush.msra.mxu0 %v109
    %185 = vmatpush.msra.mxu0 %v79
    %186 = vmatpush.msra.mxu0 %v75
    %187 = vmatmul.f32.gmra.mxu0 %v96
    %v188 = vpop.f32.mrf.mxu0
    %v189 = vadd.f32 %v89, %v188
    %190 = vdwg.mxu0
    %v191 = vld [vmem:[#allocation2] sm:$0xff]
    %v192 = vld [vmem:[#allocation2 + $0x8] sm:$0xff]
    %v193 = vld [vmem:[#allocation2 + $0x10] sm:$0xff]
    %v194 = vld [vmem:[#allocation2 + $0x18] sm:$0xff]
    %v195 = vld [vmem:[#allocation2 + $0x20] sm:$0xff]
    %v196 = vld [vmem:[#allocation2 + $0x28] sm:$0xff]
    %v197 = vld [vmem:[#allocation2 + $0x30] sm:$0xff]
    %v198 = vld [vmem:[#allocation2 + $0x38] sm:$0xff]
    %v199 = vld [vmem:[#allocation2 + $0x40] sm:$0xff]
    %v200 = vld [vmem:[#allocation2 + $0x48] sm:$0xff]
    %v201 = vld [vmem:[#allocation2 + $0x50] sm:$0xff]
    %v202 = vld [vmem:[#allocation2 + $0x58] sm:$0xff]
    %v203 = vld [vmem:[#allocation2 + $0x60] sm:$0xff]
    %v204 = vld [vmem:[#allocation2 + $0x68] sm:$0xff]
    %v205 = vld [vmem:[#allocation2 + $0x70] sm:$0xff]
    %v206 = vld [vmem:[#allocation2 + $0x78] sm:$0xff]
    %v207 = vld [vmem:[#allocation2 + $0x80] sm:$0xff]
    %v208 = vld [vmem:[#allocation2 + $0x88] sm:$0xff]
    %v209 = vld [vmem:[#allocation2 + $0x90] sm:$0xff]
    %v210 = vld [vmem:[#allocation2 + $0x98] sm:$0xff]
    %v211 = vld [vmem:[#allocation2 + $0xa0] sm:$0xff]
    %v212 = vld [vmem:[#allocation2 + $0xa8] sm:$0xff]
    %v213 = vld [vmem:[#allocation2 + $0xb0] sm:$0xff]
    %v214 = vld [vmem:[#allocation2 + $0xb8] sm:$0xff]
    %v215 = vld [vmem:[#allocation2 + $0xc0] sm:$0xff]
    %v216 = vld [vmem:[#allocation2 + $0xc8] sm:$0xff]
    %v217 = vld [vmem:[#allocation2 + $0xd0] sm:$0xff]
    %v218 = vld [vmem:[#allocation2 + $0xd8] sm:$0xff]
    %v219 = vld [vmem:[#allocation2 + $0xe0] sm:$0xff]
    %v220 = vld [vmem:[#allocation2 + $0xe8] sm:$0xff]
    %v221 = vld [vmem:[#allocation2 + $0xf0] sm:$0xff]
    %v222 = vld [vmem:[#allocation2 + $0xf8] sm:$0xff]
    %v223 = vld [vmem:[#allocation2 + $0x100] sm:$0xff]
    %v224 = vld [vmem:[#allocation2 + $0x108] sm:$0xff]
    %v225 = vld [vmem:[#allocation2 + $0x110] sm:$0xff]
    %v226 = vld [vmem:[#allocation2 + $0x118] sm:$0xff]
    %v227 = vld [vmem:[#allocation2 + $0x120] sm:$0xff]
    %v228 = vld [vmem:[#allocation2 + $0x128] sm:$0xff]
    %v229 = vld [vmem:[#allocation2 + $0x130] sm:$0xff]
    %v230 = vld [vmem:[#allocation2 + $0x138] sm:$0xff]
    %v231 = vld [vmem:[#allocation2 + $0x140] sm:$0xff]
    %v232 = vld [vmem:[#allocation2 + $0x148] sm:$0xff]
    %v233 = vld [vmem:[#allocation2 + $0x150] sm:$0xff]
    %v234 = vld [vmem:[#allocation2 + $0x158] sm:$0xff]
    %v235 = vld [vmem:[#allocation2 + $0x160] sm:$0xff]
    %v236 = vld [vmem:[#allocation2 + $0x168] sm:$0xff]
    %v237 = vld [vmem:[#allocation2 + $0x170] sm:$0xff]
    %v238 = vld [vmem:[#allocation2 + $0x178] sm:$0xff]
    %v239 = vld [vmem:[#allocation2 + $0x180] sm:$0xff]
    %v240 = vld [vmem:[#allocation2 + $0x188] sm:$0xff]
    %v241 = vld [vmem:[#allocation2 + $0x190] sm:$0xff]
    %v242 = vld [vmem:[#allocation2 + $0x198] sm:$0xff]
    %v243 = vld [vmem:[#allocation2 + $0x1a0] sm:$0xff]
    %v244 = vld [vmem:[#allocation2 + $0x1a8] sm:$0xff]
    %v245 = vld [vmem:[#allocation2 + $0x1b0] sm:$0xff]
    %v246 = vld [vmem:[#allocation2 + $0x1b8] sm:$0xff]
    %v247 = vld [vmem:[#allocation2 + $0x1c0] sm:$0xff]
    %v248 = vld [vmem:[#allocation2 + $0x1c8] sm:$0xff]
    %v249 = vld [vmem:[#allocation2 + $0x1d0] sm:$0xff]
    %v250 = vld [vmem:[#allocation2 + $0x1d8] sm:$0xff]
    %v251 = vld [vmem:[#allocation2 + $0x1e0] sm:$0xff]
    %v252 = vld [vmem:[#allocation2 + $0x1e8] sm:$0xff]
    %v253 = vld [vmem:[#allocation2 + $0x1f0] sm:$0xff]
    %v254 = vld [vmem:[#allocation2 + $0x1f8] sm:$0xff]
    %v255 = vld [vmem:[%s7] sm:$0x3]
    %v256 = vld [vmem:[%s8] sm:$0x3]
    %257 = vmatpush.msra.mxu0 %v251
    %258 = vmatpush.msra.mxu0 %v247
    %259 = vmatpush.msra.mxu0 %v243
    %260 = vmatpush.msra.mxu0 %v239
    %261 = vmatpush.msra.mxu0 %v235
    %262 = vmatpush.msra.mxu0 %v231
    %263 = vmatpush.msra.mxu0 %v227
    %264 = vmatpush.msra.mxu0 %v223
    %265 = vmatpush.msra.mxu0 %v219
    %266 = vmatpush.msra.mxu0 %v215
    %267 = vmatpush.msra.mxu0 %v211
    %268 = vmatpush.msra.mxu0 %v207
    %269 = vmatpush.msra.mxu0 %v203
    %270 = vmatpush.msra.mxu0 %v199
    %271 = vmatpush.msra.mxu0 %v195
    %272 = vmatpush.msra.mxu0 %v191
    %273 = vmatmul.f32.gmra.mxu0 %v255
    %v274 = vpop.f32.mrf.mxu0
    %v275 = vadd.f32 0.0, %v274
    %276 = vdwg.mxu0
    %277 = vmatpush.msra.mxu0 %v252
    %278 = vmatpush.msra.mxu0 %v248
    %279 = vmatpush.msra.mxu0 %v244
    %280 = vmatpush.msra.mxu0 %v240
    %281 = vmatpush.msra.mxu0 %v236
    %282 = vmatpush.msra.mxu0 %v232
    %283 = vmatpush.msra.mxu0 %v228
    %284 = vmatpush.msra.mxu0 %v224
    %285 = vmatpush.msra.mxu0 %v220
    %286 = vmatpush.msra.mxu0 %v216
    %287 = vmatpush.msra.mxu0 %v212
    %288 = vmatpush.msra.mxu0 %v208
    %289 = vmatpush.msra.mxu0 %v204
    %290 = vmatpush.msra.mxu0 %v200
    %291 = vmatpush.msra.mxu0 %v196
    %292 = vmatpush.msra.mxu0 %v192
    %293 = vmatmul.f32.gmra.mxu0 %v255
    %v294 = vpop.f32.mrf.mxu0
    %v295 = vadd.f32 0.0, %v294
    %296 = vdwg.mxu0
    %297 = vmatpush.msra.mxu0 %v253
    %298 = vmatpush.msra.mxu0 %v249
    %299 = vmatpush.msra.mxu0 %v245
    %300 = vmatpush.msra.mxu0 %v241
    %301 = vmatpush.msra.mxu0 %v237
    %302 = vmatpush.msra.mxu0 %v233
    %303 = vmatpush.msra.mxu0 %v229
    %304 = vmatpush.msra.mxu0 %v225
    %305 = vmatpush.msra.mxu0 %v221
    %306 = vmatpush.msra.mxu0 %v217
    %307 = vmatpush.msra.mxu0 %v213
    %308 = vmatpush.msra.mxu0 %v209
    %309 = vmatpush.msra.mxu0 %v205
    %310 = vmatpush.msra.mxu0 %v201
    %311 = vmatpush.msra.mxu0 %v197
    %312 = vmatpush.msra.mxu0 %v193
    %313 = vmatmul.f32.gmra.mxu0 %v255
    %v314 = vpop.f32.mrf.mxu0
    %v315 = vadd.f32 0.0, %v314
    %316 = vdwg.mxu0
    %317 = vmatpush.msra.mxu0 %v254
    %318 = vmatpush.msra.mxu0 %v250
    %319 = vmatpush.msra.mxu0 %v246
    %320 = vmatpush.msra.mxu0 %v242
    %321 = vmatpush.msra.mxu0 %v238
    %322 = vmatpush.msra.mxu0 %v234
    %323 = vmatpush.msra.mxu0 %v230
    %324 = vmatpush.msra.mxu0 %v226
    %325 = vmatpush.msra.mxu0 %v222
    %326 = vmatpush.msra.mxu0 %v218
    %327 = vmatpush.msra.mxu0 %v214
    %328 = vmatpush.msra.mxu0 %v210
    %329 = vmatpush.msra.mxu0 %v206
    %330 = vmatpush.msra.mxu0 %v202
    %331 = vmatpush.msra.mxu0 %v198
    %332 = vmatpush.msra.mxu0 %v194
    %333 = vmatmul.f32.gmra.mxu0 %v255
    %v334 = vpop.f32.mrf.mxu0
    %v335 = vadd.f32 0.0, %v334
    %336 = vdwg.mxu0
    %v337 = vadd.f32 %v129, %v275
    %v338 = vadd.f32 %v149, %v295
    %v339 = vadd.f32 %v169, %v315
    %v340 = vadd.f32 %v189, %v335
    %v341 = vxor.u32 %v337, 2147483648
    %v342 = vxor.u32 %v338, 2147483648
    %v343 = vxor.u32 %v340, 2147483648
    %v344 = vmul.f32 %v341, 1.442695
    %v345 = vpow.pop %v344
    %v346 = vmul.f32 %v342, 1.442695
    %v347 = vpow.pop %v346
    %v348 = vmul.f32 %v343, 1.442695
    %v349 = vpow.pop %v348
    %v350 = vadd.f32 %v345, 1.0
    %v351 = vadd.f32 %v347, 1.0
    %v352 = vadd.f32 %v349, 1.0
    %v353 = vrcp.pop %v350
    %v354 = vmul.f32 %v350, %v353
    %v355 = vsub.f32 1.0, %v354
    %v356 = vmul.f32 %v353, %v355
    %v357 = vadd.f32 %v353, %v356
    %vm358 = vweird.f32 %v350
    %vm359 = vweird.f32 %v353
    %vm360 = vmor %vm358, %vm359
    %v361 = vsel %vm360, %v353, %v357
    %v362 = vand.u32 2147483647, %v350
    %vm363 = vcmp.eq.f32.partialorder %v362, 8.507059e+37
    %v364 = vand.u32 %v350, 2147483648
    %v365 = vor.u32 1.1754944e-38, %v364
    %v366 = vsel %vm363, %v365, %v361
    %v367 = vmul.f32 1.0, %v366
    %v368 = vrcp.pop %v351
    %v369 = vmul.f32 %v351, %v368
    %v370 = vsub.f32 1.0, %v369
    %v371 = vmul.f32 %v368, %v370
    %v372 = vadd.f32 %v368, %v371
    %vm373 = vweird.f32 %v351
    %vm374 = vweird.f32 %v368
    %vm375 = vmor %vm373, %vm374
    %v376 = vsel %vm375, %v368, %v372
    %v377 = vand.u32 2147483647, %v351
    %vm378 = vcmp.eq.f32.partialorder %v377, 8.507059e+37
    %v379 = vand.u32 %v351, 2147483648
    %v380 = vor.u32 1.1754944e-38, %v379
    %v381 = vsel %vm378, %v380, %v376
    %v382 = vmul.f32 1.0, %v381
    %v383 = vrcp.pop %v352
    %v384 = vmul.f32 %v352, %v383
    %v385 = vsub.f32 1.0, %v384
    %v386 = vmul.f32 %v383, %v385
    %v387 = vadd.f32 %v383, %v386
    %vm388 = vweird.f32 %v352
    %vm389 = vweird.f32 %v383
    %vm390 = vmor %vm388, %vm389
    %v391 = vsel %vm390, %v383, %v387
    %v392 = vand.u32 2147483647, %v352
    %vm393 = vcmp.eq.f32.partialorder %v392, 8.507059e+37
    %v394 = vand.u32 %v352, 2147483648
    %v395 = vor.u32 1.1754944e-38, %v394
    %v396 = vsel %vm393, %v395, %v391
    %v397 = vmul.f32 1.0, %v396
    %v398 = vtanh.pop %v339
    %v399 = vmul.f32 %v382, %v256
    %v400 = vmul.f32 %v367, %v398
    %v401 = vadd.f32 %v399, %v400
    %v402 = vtanh.pop %v401
    %v403 = vmul.f32 %v397, %v402
    %404 = vmatpush.msra.mxu0 %v251
    %405 = vmatpush.msra.mxu0 %v247
    %406 = vmatpush.msra.mxu0 %v243
    %407 = vmatpush.msra.mxu0 %v239
    %408 = vmatpush.msra.mxu0 %v235
    %409 = vmatpush.msra.mxu0 %v231
    %410 = vmatpush.msra.mxu0 %v227
    %411 = vmatpush.msra.mxu0 %v223
    %412 = vmatpush.msra.mxu0 %v219
    %413 = vmatpush.msra.mxu0 %v215
    %414 = vmatpush.msra.mxu0 %v211
    %415 = vmatpush.msra.mxu0 %v207
    %416 = vmatpush.msra.mxu0 %v203
    %417 = vmatpush.msra.mxu0 %v199
    %418 = vmatpush.msra.mxu0 %v195
    %419 = vmatpush.msra.mxu0 %v191
    %420 = vmatmul.f32.gmra.mxu0 %v403
    %v421 = vpop.f32.mrf.mxu0
    %v422 = vadd.f32 0.0, %v421
    %423 = vdwg.mxu0
    %424 = vmatpush.msra.mxu0 %v252
    %425 = vmatpush.msra.mxu0 %v248
    %426 = vmatpush.msra.mxu0 %v244
    %427 = vmatpush.msra.mxu0 %v240
    %428 = vmatpush.msra.mxu0 %v236
    %429 = vmatpush.msra.mxu0 %v232
    %430 = vmatpush.msra.mxu0 %v228
    %431 = vmatpush.msra.mxu0 %v224
    %432 = vmatpush.msra.mxu0 %v220
    %433 = vmatpush.msra.mxu0 %v216
    %434 = vmatpush.msra.mxu0 %v212
    %435 = vmatpush.msra.mxu0 %v208
    %436 = vmatpush.msra.mxu0 %v204
    %437 = vmatpush.msra.mxu0 %v200
    %438 = vmatpush.msra.mxu0 %v196
    %439 = vmatpush.msra.mxu0 %v192
    %440 = vmatmul.f32.gmra.mxu0 %v403
    %v441 = vpop.f32.mrf.mxu0
    %v442 = vadd.f32 0.0, %v441
    %443 = vdwg.mxu0
    %444 = vmatpush.msra.mxu0 %v253
    %445 = vmatpush.msra.mxu0 %v249
    %446 = vmatpush.msra.mxu0 %v245
    %447 = vmatpush.msra.mxu0 %v241
    %448 = vmatpush.msra.mxu0 %v237
    %449 = vmatpush.msra.mxu0 %v233
    %450 = vmatpush.msra.mxu0 %v229
    %451 = vmatpush.msra.mxu0 %v225
    %452 = vmatpush.msra.mxu0 %v221
    %453 = vmatpush.msra.mxu0 %v217
    %454 = vmatpush.msra.mxu0 %v213
    %455 = vmatpush.msra.mxu0 %v209
    %456 = vmatpush.msra.mxu0 %v205
    %457 = vmatpush.msra.mxu0 %v201
    %458 = vmatpush.msra.mxu0 %v197
    %459 = vmatpush.msra.mxu0 %v193
    %460 = vmatmul.f32.gmra.mxu0 %v403
    %v461 = vpop.f32.mrf.mxu0
    %v462 = vadd.f32 0.0, %v461
    %463 = vdwg.mxu0
    %464 = vmatpush.msra.mxu0 %v254
    %465 = vmatpush.msra.mxu0 %v250
    %466 = vmatpush.msra.mxu0 %v246
    %467 = vmatpush.msra.mxu0 %v242
    %468 = vmatpush.msra.mxu0 %v238
    %469 = vmatpush.msra.mxu0 %v234
    %470 = vmatpush.msra.mxu0 %v230
    %471 = vmatpush.msra.mxu0 %v226
    %472 = vmatpush.msra.mxu0 %v222
    %473 = vmatpush.msra.mxu0 %v218
    %474 = vmatpush.msra.mxu0 %v214
    %475 = vmatpush.msra.mxu0 %v210
    %476 = vmatpush.msra.mxu0 %v206
    %477 = vmatpush.msra.mxu0 %v202
    %478 = vmatpush.msra.mxu0 %v198
    %479 = vmatpush.msra.mxu0 %v194
    %480 = vmatmul.f32.gmra.mxu0 %v403
    %v481 = vpop.f32.mrf.mxu0
    %v482 = vadd.f32 0.0, %v481
    %483 = vdwg.mxu0
    %v488 = vrot.slane %v422, 6
    %v489 = vrot.slane %v442, 6
    %v490 = vrot.slane %v462, 6
    %v491 = vrot.slane %v482, 6
    %v496 = vadd.f32 %v129, %v488
    %v497 = vadd.f32 %v149, %v489
    %v498 = vadd.f32 %v169, %v490
    %v499 = vadd.f32 %v189, %v491
    %v500 = vxor.u32 %v496, 2147483648
    %v501 = vxor.u32 %v497, 2147483648
    %v502 = vxor.u32 %v499, 2147483648
    %v503 = vmul.f32 %v500, 1.442695
    %v504 = vpow.pop %v503
    %v505 = vmul.f32 %v501, 1.442695
    %v506 = vpow.pop %v505
    %v507 = vmul.f32 %v502, 1.442695
    %v508 = vpow.pop %v507
    %v509 = vadd.f32 %v504, 1.0
    %v510 = vadd.f32 %v506, 1.0
    %v511 = vadd.f32 %v508, 1.0
    %v512 = vrcp.pop %v509
    %v513 = vmul.f32 %v509, %v512
    %v514 = vsub.f32 1.0, %v513
    %v515 = vmul.f32 %v512, %v514
    %v516 = vadd.f32 %v512, %v515
    %vm517 = vweird.f32 %v509
    %vm518 = vweird.f32 %v512
    %vm519 = vmor %vm517, %vm518
    %v520 = vsel %vm519, %v512, %v516
    %v521 = vand.u32 2147483647, %v509
    %vm522 = vcmp.eq.f32.partialorder %v521, 8.507059e+37
    %v523 = vand.u32 %v509, 2147483648
    %v524 = vor.u32 1.1754944e-38, %v523
    %v525 = vsel %vm522, %v524, %v520
    %v526 = vmul.f32 1.0, %v525
    %v527 = vrcp.pop %v510
    %v528 = vmul.f32 %v510, %v527
    %v529 = vsub.f32 1.0, %v528
    %v530 = vmul.f32 %v527, %v529
    %v531 = vadd.f32 %v527, %v530
    %vm532 = vweird.f32 %v510
    %vm533 = vweird.f32 %v527
    %vm534 = vmor %vm532, %vm533
    %v535 = vsel %vm534, %v527, %v531
    %v536 = vand.u32 2147483647, %v510
    %vm537 = vcmp.eq.f32.partialorder %v536, 8.507059e+37
    %v538 = vand.u32 %v510, 2147483648
    %v539 = vor.u32 1.1754944e-38, %v538
    %v540 = vsel %vm537, %v539, %v535
    %v541 = vmul.f32 1.0, %v540
    %v542 = vrcp.pop %v511
    %v543 = vmul.f32 %v511, %v542
    %v544 = vsub.f32 1.0, %v543
    %v545 = vmul.f32 %v542, %v544
    %v546 = vadd.f32 %v542, %v545
    %vm547 = vweird.f32 %v511
    %vm548 = vweird.f32 %v542
    %vm549 = vmor %vm547, %vm548
    %v550 = vsel %vm549, %v542, %v546
    %v551 = vand.u32 2147483647, %v511
    %vm552 = vcmp.eq.f32.partialorder %v551, 8.507059e+37
    %v553 = vand.u32 %v511, 2147483648
    %v554 = vor.u32 1.1754944e-38, %v553
    %v555 = vsel %vm552, %v554, %v550
    %v556 = vmul.f32 1.0, %v555
    %v557 = vtanh.pop %v498
    %v559 = vrot.slane %v401, 6
    %v561 = vmul.f32 %v541, %v559
    %v562 = vmul.f32 %v526, %v557
    %v563 = vadd.f32 %v561, %v562
    %v564 = vtanh.pop %v563
    %v565 = vmul.f32 %v556, %v564
    %v567 = vrot.slane %v565, 2
    %569 = vmatpush.msra.mxu0 %v251
    %570 = vmatpush.msra.mxu0 %v247
    %571 = vmatpush.msra.mxu0 %v243
    %572 = vmatpush.msra.mxu0 %v239
    %573 = vmatpush.msra.mxu0 %v235
    %574 = vmatpush.msra.mxu0 %v231
    %575 = vmatpush.msra.mxu0 %v227
    %576 = vmatpush.msra.mxu0 %v223
    %577 = vmatpush.msra.mxu0 %v219
    %578 = vmatpush.msra.mxu0 %v215
    %579 = vmatpush.msra.mxu0 %v211
    %580 = vmatpush.msra.mxu0 %v207
    %581 = vmatpush.msra.mxu0 %v203
    %582 = vmatpush.msra.mxu0 %v199
    %583 = vmatpush.msra.mxu0 %v195
    %584 = vmatpush.msra.mxu0 %v191
    %585 = vmatmul.f32.gmra.mxu0 %v567
    %v586 = vpop.f32.mrf.mxu0
    %v587 = vadd.f32 0.0, %v586
    %588 = vdwg.mxu0
    %589 = vmatpush.msra.mxu0 %v252
    %590 = vmatpush.msra.mxu0 %v248
    %591 = vmatpush.msra.mxu0 %v244
    %592 = vmatpush.msra.mxu0 %v240
    %593 = vmatpush.msra.mxu0 %v236
    %594 = vmatpush.msra.mxu0 %v232
    %595 = vmatpush.msra.mxu0 %v228
    %596 = vmatpush.msra.mxu0 %v224
    %597 = vmatpush.msra.mxu0 %v220
    %598 = vmatpush.msra.mxu0 %v216
    %599 = vmatpush.msra.mxu0 %v212
    %600 = vmatpush.msra.mxu0 %v208
    %601 = vmatpush.msra.mxu0 %v204
    %602 = vmatpush.msra.mxu0 %v200
    %603 = vmatpush.msra.mxu0 %v196
    %604 = vmatpush.msra.mxu0 %v192
    %605 = vmatmul.f32.gmra.mxu0 %v567
    %v606 = vpop.f32.mrf.mxu0
    %v607 = vadd.f32 0.0, %v606
    %608 = vdwg.mxu0
    %609 = vmatpush.msra.mxu0 %v253
    %610 = vmatpush.msra.mxu0 %v249
    %611 = vmatpush.msra.mxu0 %v245
    %612 = vmatpush.msra.mxu0 %v241
    %613 = vmatpush.msra.mxu0 %v237
    %614 = vmatpush.msra.mxu0 %v233
    %615 = vmatpush.msra.mxu0 %v229
    %616 = vmatpush.msra.mxu0 %v225
    %617 = vmatpush.msra.mxu0 %v221
    %618 = vmatpush.msra.mxu0 %v217
    %619 = vmatpush.msra.mxu0 %v213
    %620 = vmatpush.msra.mxu0 %v209
    %621 = vmatpush.msra.mxu0 %v205
    %622 = vmatpush.msra.mxu0 %v201
    %623 = vmatpush.msra.mxu0 %v197
    %624 = vmatpush.msra.mxu0 %v193
    %625 = vmatmul.f32.gmra.mxu0 %v567
    %v626 = vpop.f32.mrf.mxu0
    %v627 = vadd.f32 0.0, %v626
    %628 = vdwg.mxu0
    %629 = vmatpush.msra.mxu0 %v254
    %630 = vmatpush.msra.mxu0 %v250
    %631 = vmatpush.msra.mxu0 %v246
    %632 = vmatpush.msra.mxu0 %v242
    %633 = vmatpush.msra.mxu0 %v238
    %634 = vmatpush.msra.mxu0 %v234
    %635 = vmatpush.msra.mxu0 %v230
    %636 = vmatpush.msra.mxu0 %v226
    %637 = vmatpush.msra.mxu0 %v222
    %638 = vmatpush.msra.mxu0 %v218
    %639 = vmatpush.msra.mxu0 %v214
    %640 = vmatpush.msra.mxu0 %v210
    %641 = vmatpush.msra.mxu0 %v206
    %642 = vmatpush.msra.mxu0 %v202
    %643 = vmatpush.msra.mxu0 %v198
    %644 = vmatpush.msra.mxu0 %v194
    %645 = vmatmul.f32.gmra.mxu0 %v567
    %v646 = vpop.f32.mrf.mxu0
    %v647 = vadd.f32 0.0, %v646
    %648 = vdwg.mxu0
    %v653 = vrot.slane %v587, 4
    %v654 = vrot.slane %v607, 4
    %v655 = vrot.slane %v627, 4
    %v656 = vrot.slane %v647, 4
    %v661 = vadd.f32 %v129, %v653
    %v662 = vadd.f32 %v149, %v654
    %v663 = vadd.f32 %v169, %v655
    %v664 = vadd.f32 %v189, %v656
    %v665 = vxor.u32 %v661, 2147483648
    %v666 = vxor.u32 %v662, 2147483648
    %v667 = vxor.u32 %v664, 2147483648
    %v668 = vmul.f32 %v665, 1.442695
    %v669 = vpow.pop %v668
    %v670 = vmul.f32 %v666, 1.442695
    %v671 = vpow.pop %v670
    %v672 = vmul.f32 %v667, 1.442695
    %v673 = vpow.pop %v672
    %v674 = vadd.f32 %v669, 1.0
    %v675 = vadd.f32 %v671, 1.0
    %v676 = vadd.f32 %v673, 1.0
    %v677 = vrcp.pop %v674
    %v678 = vmul.f32 %v674, %v677
    %v679 = vsub.f32 1.0, %v678
    %v680 = vmul.f32 %v677, %v679
    %v681 = vadd.f32 %v677, %v680
    %vm682 = vweird.f32 %v674
    %vm683 = vweird.f32 %v677
    %vm684 = vmor %vm682, %vm683
    %v685 = vsel %vm684, %v677, %v681
    %v686 = vand.u32 2147483647, %v674
    %vm687 = vcmp.eq.f32.partialorder %v686, 8.507059e+37
    %v688 = vand.u32 %v674, 2147483648
    %v689 = vor.u32 1.1754944e-38, %v688
    %v690 = vsel %vm687, %v689, %v685
    %v691 = vmul.f32 1.0, %v690
    %v692 = vrcp.pop %v675
    %v693 = vmul.f32 %v675, %v692
    %v694 = vsub.f32 1.0, %v693
    %v695 = vmul.f32 %v692, %v694
    %v696 = vadd.f32 %v692, %v695
    %vm697 = vweird.f32 %v675
    %vm698 = vweird.f32 %v692
    %vm699 = vmor %vm697, %vm698
    %v700 = vsel %vm699, %v692, %v696
    %v701 = vand.u32 2147483647, %v675
    %vm702 = vcmp.eq.f32.partialorder %v701, 8.507059e+37
    %v703 = vand.u32 %v675, 2147483648
    %v704 = vor.u32 1.1754944e-38, %v703
    %v705 = vsel %vm702, %v704, %v700
    %v706 = vmul.f32 1.0, %v705
    %v707 = vrcp.pop %v676
    %v708 = vmul.f32 %v676, %v707
    %v709 = vsub.f32 1.0, %v708
    %v710 = vmul.f32 %v707, %v709
    %v711 = vadd.f32 %v707, %v710
    %vm712 = vweird.f32 %v676
    %vm713 = vweird.f32 %v707
    %vm714 = vmor %vm712, %vm713
    %v715 = vsel %vm714, %v707, %v711
    %v716 = vand.u32 2147483647, %v676
    %vm717 = vcmp.eq.f32.partialorder %v716, 8.507059e+37
    %v718 = vand.u32 %v676, 2147483648
    %v719 = vor.u32 1.1754944e-38, %v718
    %v720 = vsel %vm717, %v719, %v715
    %v721 = vmul.f32 1.0, %v720
    %v722 = vtanh.pop %v663
    %v724 = vrot.slane %v563, 6
    %v726 = vmul.f32 %v706, %v724
    %v727 = vmul.f32 %v691, %v722
    %v728 = vadd.f32 %v726, %v727
    %v729 = vtanh.pop %v728
    %v730 = vmul.f32 %v721, %v729
    %v732 = vrot.slane %v730, 4
    %734 = vmatpush.msra.mxu0 %v251
    %735 = vmatpush.msra.mxu0 %v247
    %736 = vmatpush.msra.mxu0 %v243
    %737 = vmatpush.msra.mxu0 %v239
    %738 = vmatpush.msra.mxu0 %v235
    %739 = vmatpush.msra.mxu0 %v231
    %740 = vmatpush.msra.mxu0 %v227
    %741 = vmatpush.msra.mxu0 %v223
    %742 = vmatpush.msra.mxu0 %v219
    %743 = vmatpush.msra.mxu0 %v215
    %744 = vmatpush.msra.mxu0 %v211
    %745 = vmatpush.msra.mxu0 %v207
    %746 = vmatpush.msra.mxu0 %v203
    %747 = vmatpush.msra.mxu0 %v199
    %748 = vmatpush.msra.mxu0 %v195
    %749 = vmatpush.msra.mxu0 %v191
    %750 = vmatmul.f32.gmra.mxu0 %v732
    %v751 = vpop.f32.mrf.mxu0
    %v752 = vadd.f32 0.0, %v751
    %753 = vdwg.mxu0
    %754 = vmatpush.msra.mxu0 %v252
    %755 = vmatpush.msra.mxu0 %v248
    %756 = vmatpush.msra.mxu0 %v244
    %757 = vmatpush.msra.mxu0 %v240
    %758 = vmatpush.msra.mxu0 %v236
    %759 = vmatpush.msra.mxu0 %v232
    %760 = vmatpush.msra.mxu0 %v228
    %761 = vmatpush.msra.mxu0 %v224
    %762 = vmatpush.msra.mxu0 %v220
    %763 = vmatpush.msra.mxu0 %v216
    %764 = vmatpush.msra.mxu0 %v212
    %765 = vmatpush.msra.mxu0 %v208
    %766 = vmatpush.msra.mxu0 %v204
    %767 = vmatpush.msra.mxu0 %v200
    %768 = vmatpush.msra.mxu0 %v196
    %769 = vmatpush.msra.mxu0 %v192
    %770 = vmatmul.f32.gmra.mxu0 %v732
    %v771 = vpop.f32.mrf.mxu0
    %v772 = vadd.f32 0.0, %v771
    %773 = vdwg.mxu0
    %774 = vmatpush.msra.mxu0 %v253
    %775 = vmatpush.msra.mxu0 %v249
    %776 = vmatpush.msra.mxu0 %v245
    %777 = vmatpush.msra.mxu0 %v241
    %778 = vmatpush.msra.mxu0 %v237
    %779 = vmatpush.msra.mxu0 %v233
    %780 = vmatpush.msra.mxu0 %v229
    %781 = vmatpush.msra.mxu0 %v225
    %782 = vmatpush.msra.mxu0 %v221
    %783 = vmatpush.msra.mxu0 %v217
    %784 = vmatpush.msra.mxu0 %v213
    %785 = vmatpush.msra.mxu0 %v209
    %786 = vmatpush.msra.mxu0 %v205
    %787 = vmatpush.msra.mxu0 %v201
    %788 = vmatpush.msra.mxu0 %v197
    %789 = vmatpush.msra.mxu0 %v193
    %790 = vmatmul.f32.gmra.mxu0 %v732
    %v791 = vpop.f32.mrf.mxu0
    %v792 = vadd.f32 0.0, %v791
    %793 = vdwg.mxu0
    %794 = vmatpush.msra.mxu0 %v254
    %795 = vmatpush.msra.mxu0 %v250
    %796 = vmatpush.msra.mxu0 %v246
    %797 = vmatpush.msra.mxu0 %v242
    %798 = vmatpush.msra.mxu0 %v238
    %799 = vmatpush.msra.mxu0 %v234
    %800 = vmatpush.msra.mxu0 %v230
    %801 = vmatpush.msra.mxu0 %v226
    %802 = vmatpush.msra.mxu0 %v222
    %803 = vmatpush.msra.mxu0 %v218
    %804 = vmatpush.msra.mxu0 %v214
    %805 = vmatpush.msra.mxu0 %v210
    %806 = vmatpush.msra.mxu0 %v206
    %807 = vmatpush.msra.mxu0 %v202
    %808 = vmatpush.msra.mxu0 %v198
    %809 = vmatpush.msra.mxu0 %v194
    %810 = vmatmul.f32.gmra.mxu0 %v732
    %v811 = vpop.f32.mrf.mxu0
    %v812 = vadd.f32 0.0, %v811
    %813 = vdwg.mxu0
    %v818 = vrot.slane %v752, 2
    %v819 = vrot.slane %v772, 2
    %v820 = vrot.slane %v792, 2
    %v821 = vrot.slane %v812, 2
    %v826 = vadd.f32 %v129, %v818
    %v827 = vadd.f32 %v149, %v819
    %v828 = vadd.f32 %v169, %v820
    %v829 = vadd.f32 %v189, %v821
    %v830 = vxor.u32 %v826, 2147483648
    %v831 = vxor.u32 %v827, 2147483648
    %v832 = vxor.u32 %v829, 2147483648
    %v833 = vmul.f32 %v830, 1.442695
    %v834 = vpow.pop %v833
    %v835 = vmul.f32 %v831, 1.442695
    %v836 = vpow.pop %v835
    %v837 = vmul.f32 %v832, 1.442695
    %v838 = vpow.pop %v837
    %v839 = vadd.f32 %v834, 1.0
    %v840 = vadd.f32 %v836, 1.0
    %v841 = vadd.f32 %v838, 1.0
    %v842 = vrcp.pop %v839
    %v843 = vmul.f32 %v839, %v842
    %v844 = vsub.f32 1.0, %v843
    %v845 = vmul.f32 %v842, %v844
    %v846 = vadd.f32 %v842, %v845
    %vm847 = vweird.f32 %v839
    %vm848 = vweird.f32 %v842
    %vm849 = vmor %vm847, %vm848
    %v850 = vsel %vm849, %v842, %v846
    %v851 = vand.u32 2147483647, %v839
    %vm852 = vcmp.eq.f32.partialorder %v851, 8.507059e+37
    %v853 = vand.u32 %v839, 2147483648
    %v854 = vor.u32 1.1754944e-38, %v853
    %v855 = vsel %vm852, %v854, %v850
    %v856 = vmul.f32 1.0, %v855
    %v857 = vrcp.pop %v840
    %v858 = vmul.f32 %v840, %v857
    %v859 = vsub.f32 1.0, %v858
    %v860 = vmul.f32 %v857, %v859
    %v861 = vadd.f32 %v857, %v860
    %vm862 = vweird.f32 %v840
    %vm863 = vweird.f32 %v857
    %vm864 = vmor %vm862, %vm863
    %v865 = vsel %vm864, %v857, %v861
    %v866 = vand.u32 2147483647, %v840
    %vm867 = vcmp.eq.f32.partialorder %v866, 8.507059e+37
    %v868 = vand.u32 %v840, 2147483648
    %v869 = vor.u32 1.1754944e-38, %v868
    %v870 = vsel %vm867, %v869, %v865
    %v871 = vmul.f32 1.0, %v870
    %v872 = vrcp.pop %v841
    %v873 = vmul.f32 %v841, %v872
    %v874 = vsub.f32 1.0, %v873
    %v875 = vmul.f32 %v872, %v874
    %v876 = vadd.f32 %v872, %v875
    %vm877 = vweird.f32 %v841
    %vm878 = vweird.f32 %v872
    %vm879 = vmor %vm877, %vm878
    %v880 = vsel %vm879, %v872, %v876
    %v881 = vand.u32 2147483647, %v841
    %vm882 = vcmp.eq.f32.partialorder %v881, 8.507059e+37
    %v883 = vand.u32 %v841, 2147483648
    %v884 = vor.u32 1.1754944e-38, %v883
    %v885 = vsel %vm882, %v884, %v880
    %v886 = vmul.f32 1.0, %v885
    %v887 = vtanh.pop %v828
    %v889 = vrot.slane %v728, 6
    %v891 = vmul.f32 %v871, %v889
    %v892 = vmul.f32 %v856, %v887
    %v893 = vadd.f32 %v891, %v892
    %v894 = vtanh.pop %v893
    %v895 = vmul.f32 %v886, %v894
    %896 = vst [vmem:[#allocation6 - $0x6] sm:$0xc0] %v895
    %897 = vst [vmem:[#allocation8 - $0x6] sm:$0xc0] %v893
    %vm898 = vcmask 1041408
    %v899 = vsel %vm898, %v403, %v565
    %v900 = vsel %vm98, %v899, %v730
    %vm901 = vcmask 1045504
    %v902 = vsel %vm901, %v900, %v895
    %v903 = vld [vmem:[%s9] sm:$0xff]
    %v904 = vld [vmem:[%s9 + $0x8] sm:$0xff]
    %v905 = vld [vmem:[%s10] sm:$0xff]
    %v906 = vld [vmem:[%s10 + $0x8] sm:$0xff]
    %907 = vmatpush.xpose.msra.mxu0 0.0
    %908 = vmatpush.xpose.msra.mxu0 0.0
    %909 = vmatpush.xpose.msra.mxu0 0.0
    %910 = vmatpush.xpose.msra.mxu0 0.0
    %911 = vmatpush.xpose.msra.mxu0 0.0
    %912 = vmatpush.xpose.msra.mxu0 0.0
    %913 = vmatpush.xpose.msra.mxu0 0.0
    %914 = vmatpush.xpose.msra.mxu0 0.0
    %915 = vmatpush.xpose.msra.mxu0 0.0
    %916 = vmatpush.xpose.msra.mxu0 0.0
    %917 = vmatpush.xpose.msra.mxu0 0.0
    %918 = vmatpush.xpose.msra.mxu0 0.0
    %919 = vmatpush.xpose.msra.mxu0 0.0
    %920 = vmatpush.xpose.msra.mxu0 0.0
    %921 = vmatpush.xpose.msra.mxu0 0.0
    %922 = vmatpush.xpose.msra.mxu0 %v902
    %923 = vmatmul.f32.gmra.mxu0 %v903
    %v924 = vpop.f32.mrf.mxu0
    %v925 = vadd.f32 %v905, %v924
    %926 = vmatmul.f32.gmra.mxu0 %v904
    %v927 = vpop.f32.mrf.mxu0
    %v928 = vadd.f32 %v906, %v927
    %929 = vdwg.mxu0
    %vm930 = vcmask 64512
    %v931 = vsel %vm930, %v925, -inf
    %v932 = vsel %vm930, %v928, -inf
    %v933 = vmax.f32 %v931, %v932
    %v934 = vrot.slane %v933, 4
    %v935 = vmax.f32 %v933, %v934
    %v936 = vrot.slane %v935, 2
    %v937 = vmax.f32 %v935, %v936
    %v938 = vrot.slane %v937, 1
    %v939 = vmax.f32 %v937, %v938
    %v940 = vsub.f32 %v925, %v939
    %v941 = vsub.f32 %v928, %v939
    %v942 = vmul.f32 %v940, 1.442695
    %v943 = vpow.pop %v942
    %v944 = vmul.f32 %v941, 1.442695
    %v945 = vpow.pop %v944
    %v946 = vsel %vm930, %v943, 0.0
    %v947 = vsel %vm930, %v945, 0.0
    %v948 = vadd.f32 %v946, %v947
    %v949 = vrot.slane %v948, 4
    %v950 = vadd.f32 %v948, %v949
    %v951 = vrot.slane %v950, 2
    %v952 = vadd.f32 %v950, %v951
    %v953 = vrot.slane %v952, 1
    %v954 = vadd.f32 %v952, %v953
    %v955 = vrcp.pop %v954
    %v956 = vmul.f32 %v954, %v955
    %v957 = vsub.f32 1.0, %v956
    %v958 = vmul.f32 %v955, %v957
    %v959 = vadd.f32 %v955, %v958
    %vm960 = vweird.f32 %v954
    %vm961 = vweird.f32 %v955
    %vm962 = vmor %vm960, %vm961
    %v963 = vsel %vm962, %v955, %v959
    %v964 = vand.u32 2147483647, %v954
    %vm965 = vcmp.eq.f32.partialorder %v964, 8.507059e+37
    %v966 = vand.u32 %v954, 2147483648
    %v967 = vor.u32 1.1754944e-38, %v966
    %v968 = vsel %vm965, %v967, %v963
    %v969 = vmul.f32 %v943, %v968
    %v970 = vmul.f32 %v945, %v968
    %v971 = vld [vmem:[%s11] sm:$0xff]
    %v973 = vsel %vm930, %v969, 0
    %v976 = vsel %vm930, %v970, 0
    %978 = vmatpush.msra.mxu0 0.0
    %979 = vmatpush.msra.mxu0 0.0
    %980 = vmatpush.msra.mxu0 0.0
    %981 = vmatpush.msra.mxu0 0.0
    %982 = vmatpush.msra.mxu0 0.0
    %983 = vmatpush.msra.mxu0 0.0
    %984 = vmatpush.msra.mxu0 0.0
    %985 = vmatpush.msra.mxu0 0.0
    %986 = vmatpush.msra.mxu0 0.0
    %987 = vmatpush.msra.mxu0 0.0
    %988 = vmatpush.msra.mxu0 0.0
    %989 = vmatpush.msra.mxu0 0.0
    %990 = vmatpush.msra.mxu0 0.0
    %991 = vmatpush.msra.mxu0 0.0
    %992 = vmatpush.msra.mxu0 0.0
    %993 = vmatpush.msra.mxu0 %v971
    %994 = vmatmul.f32.gmra.mxu0 %v973
    %v995 = vpop.f32.mrf.mxu0
    %v996 = vadd.f32 0.0, %v995
    %997 = vmatmul.f32.gmra.mxu0 %v976
    %v998 = vpop.f32.mrf.mxu0
    %v999 = vadd.f32 0.0, %v998
    %1000 = vdwg.mxu0
    %vm1001 = vcmask 31744
    %1002 = vst.msk [vmem:[%s15] sm:$0xff] %vm1001, %v996
    %1003 = vst.msk [vmem:[%s15 + $0x8] sm:$0xff] %vm1001, %v999
    %1004 = vxpose.xlu0.b32.start [1/16] %v969, 128
    %1005 = vxpose.xlu0.b32.cont [2/16] %v970, 128
    %1006 = vxpose.xlu0.b32.cont [3/16] 0.0, 128
    %1007 = vxpose.xlu0.b32.cont [4/16] 0.0, 128
    %1008 = vxpose.xlu0.b32.cont [5/16] 0.0, 128
    %1009 = vxpose.xlu0.b32.cont [6/16] 0.0, 128
    %1010 = vxpose.xlu0.b32.cont [7/16] 0.0, 128
    %1011 = vxpose.xlu0.b32.cont [8/16] 0.0, 128
    %1012 = vxpose.xlu0.b32.cont [9/16] 0.0, 128
    %1013 = vxpose.xlu0.b32.cont [10/16] 0.0, 128
    %1014 = vxpose.xlu0.b32.cont [11/16] 0.0, 128
    %1015 = vxpose.xlu0.b32.cont [12/16] 0.0, 128
    %1016 = vxpose.xlu0.b32.cont [13/16] 0.0, 128
    %1017 = vxpose.xlu0.b32.cont [14/16] 0.0, 128
    %1018 = vxpose.xlu0.b32.cont [15/16] 0.0, 128
    %1019 = vxpose.xlu0.b32.end [16/16] 0.0, 128
    %v1020 = vpop.trf.xlu0
    %v1021 = vpop.trf.xlu0
    %v1022 = vpop.trf.xlu0
    %v1023 = vpop.trf.xlu0
    %v1024 = vpop.trf.xlu0
    %v1025 = vpop.trf.xlu0
    %v1026 = vpop.trf.xlu0
    %v1027 = vpop.trf.xlu0
    %v1028 = vpop.trf.xlu0
    %v1029 = vpop.trf.xlu0
    %v1030 = vpop.trf.xlu0
    %v1031 = vpop.trf.xlu0
    %v1032 = vpop.trf.xlu0
    %v1033 = vpop.trf.xlu0
    %v1034 = vpop.trf.xlu0
    %v1035 = vpop.trf.xlu0
    %vm1036 = vcmask 130048
    %v1038 = vsel %vm1036, %v1020, 0
    %1040 = vmatpush.msra.mxu0 0.0
    %1041 = vmatpush.msra.mxu0 0.0
    %1042 = vmatpush.msra.mxu0 0.0
    %1043 = vmatpush.msra.mxu0 0.0
    %1044 = vmatpush.msra.mxu0 0.0
    %1045 = vmatpush.msra.mxu0 0.0
    %1046 = vmatpush.msra.mxu0 0.0
    %1047 = vmatpush.msra.mxu0 0.0
    %1048 = vmatpush.msra.mxu0 0.0
    %1049 = vmatpush.msra.mxu0 0.0
    %1050 = vmatpush.msra.mxu0 0.0
    %1051 = vmatpush.msra.mxu0 0.0
    %1052 = vmatpush.msra.mxu0 0.0
    %1053 = vmatpush.msra.mxu0 0.0
    %1054 = vmatpush.msra.mxu0 %v904
    %1055 = vmatpush.msra.mxu0 %v903
    %1056 = vmatmul.f32.gmra.mxu0 %v1038
    %v1057 = vpop.f32.mrf.mxu0
    %v1058 = vadd.f32 0.0, %v1057
    %1059 = vdwg.mxu0
    %v1060 = vld [vmem:[%s4] sm:$0xff]
    %v1061 = vld [vmem:[%s4 + $0x8] sm:$0xff]
    %v1062 = vld [vmem:[%s4 + $0x10] sm:$0xff]
    %v1063 = vld [vmem:[%s4 + $0x18] sm:$0xff]
    %v1064 = vld [vmem:[%s4 + $0x20] sm:$0xff]
    %v1065 = vld [vmem:[%s4 + $0x28] sm:$0xff]
    %v1066 = vld [vmem:[%s4 + $0x30] sm:$0xff]
    %v1067 = vld [vmem:[%s4 + $0x38] sm:$0xff]
    %v1068 = vld [vmem:[%s4 + $0x40] sm:$0xff]
    %v1069 = vld [vmem:[%s4 + $0x48] sm:$0xff]
    %v1070 = vld [vmem:[%s4 + $0x50] sm:$0xff]
    %v1071 = vld [vmem:[%s4 + $0x58] sm:$0xff]
    %v1072 = vld [vmem:[%s4 + $0x60] sm:$0xff]
    %v1073 = vld [vmem:[%s4 + $0x68] sm:$0xff]
    %v1074 = vld [vmem:[%s4 + $0x70] sm:$0xff]
    %v1075 = vld [vmem:[%s4 + $0x78] sm:$0xff]
    %v1076 = vld [vmem:[%s5] sm:$0xff]
    %v1077 = vld [vmem:[%s5 + $0x8] sm:$0xff]
    %v1078 = vld [vmem:[%s5 + $0x10] sm:$0xff]
    %v1079 = vld [vmem:[%s5 + $0x18] sm:$0xff]
    %v1080 = vld [vmem:[%s5 + $0x20] sm:$0xff]
    %v1081 = vld [vmem:[%s5 + $0x28] sm:$0xff]
    %v1082 = vld [vmem:[%s5 + $0x30] sm:$0xff]
    %v1083 = vld [vmem:[%s5 + $0x38] sm:$0xff]
    %v1084 = vld [vmem:[%s5 + $0x40] sm:$0xff]
    %v1085 = vld [vmem:[%s5 + $0x48] sm:$0xff]
    %v1086 = vld [vmem:[%s5 + $0x50] sm:$0xff]
    %v1087 = vld [vmem:[%s5 + $0x58] sm:$0xff]
    %v1088 = vld [vmem:[%s5 + $0x60] sm:$0xff]
    %v1089 = vld [vmem:[%s5 + $0x68] sm:$0xff]
    %v1090 = vld [vmem:[%s5 + $0x70] sm:$0xff]
    %v1091 = vld [vmem:[%s5 + $0x78] sm:$0xff]
    %1092 = vmatpush.msra.mxu0 %v1091
    %1093 = vmatpush.msra.mxu0 %v1090
    %1094 = vmatpush.msra.mxu0 %v1089
    %1095 = vmatpush.msra.mxu0 %v1088
    %1096 = vmatpush.msra.mxu0 %v1087
    %1097 = vmatpush.msra.mxu0 %v1086
    %1098 = vmatpush.msra.mxu0 %v1085
    %1099 = vmatpush.msra.mxu0 %v1084
    %1100 = vmatpush.msra.mxu0 %v1083
    %1101 = vmatpush.msra.mxu0 %v1082
    %1102 = vmatpush.msra.mxu0 %v1081
    %1103 = vmatpush.msra.mxu0 %v1080
    %1104 = vmatpush.msra.mxu0 %v1079
    %1105 = vmatpush.msra.mxu0 %v1078
    %1106 = vmatpush.msra.mxu0 %v1077
    %1107 = vmatpush.msra.mxu0 %v1076
    %1108 = vmatmul.f32.gmra.mxu0 %v1058
    %v1109 = vpop.f32.mrf.mxu0
    %v1110 = vadd.f32 0.0, %v1109
    %1111 = vdwg.mxu0
    %1112 = vmatpush.msra.mxu0 %v1075
    %1113 = vmatpush.msra.mxu0 %v1074
    %1114 = vmatpush.msra.mxu0 %v1073
    %1115 = vmatpush.msra.mxu0 %v1072
    %1116 = vmatpush.msra.mxu0 %v1071
    %1117 = vmatpush.msra.mxu0 %v1070
    %1118 = vmatpush.msra.mxu0 %v1069
    %1119 = vmatpush.msra.mxu0 %v1068
    %1120 = vmatpush.msra.mxu0 %v1067
    %1121 = vmatpush.msra.mxu0 %v1066
    %1122 = vmatpush.msra.mxu0 %v1065
    %1123 = vmatpush.msra.mxu0 %v1064
    %1124 = vmatpush.msra.mxu0 %v1063
    %1125 = vmatpush.msra.mxu0 %v1062
    %1126 = vmatpush.msra.mxu0 %v1061
    %1127 = vmatpush.msra.mxu0 %v1060
    %1128 = vmatmul.f32.gmra.mxu0 %v902
    %v1129 = vpop.f32.mrf.mxu0
    %v1130 = vadd.f32 %v1110, %v1129
    %1131 = vdwg.mxu0
    %v1132 = vld [vmem:[%s6] sm:$0x1]
    %v1134 = vperm.slane %v1132, 0
    %v1136 = vadd.f32 %v1130, %v1134
    %1137 = vst.msk [vmem:[#allocation5] sm:$0xff] %vm94, %v1136
    // Predicated region
    $region54: #{tpu_custom_call.1} parent=1 // pred_check
      _
    $region55: #{tpu_custom_call.1} parent=1 // pred_check_branch
      %1139 = sbr.rel (0) target = $region57
    $region56: #{tpu_custom_call.1} parent=1 // pred_region
      %1141 = vsyncadd [#allocation4], 0
      %s1143 = sshll.u32 [#allocation5], 4
      %s1144 = int_to_ptr.vmem [resolvable:$true] %s1143
      %s1145 = sshll.u32 %s12, 4
      %s1146 = int_to_ptr.hbm [resolvable:$true] %s1145
      %1148 = dma.vmem_to_hbm [thread:$0]  %s1144, 128, %s1146, [#allocation4]
    $region57: #{tpu_custom_call.1} parent=1 // pred_fallthru
      _
    // Predicated region
    $region58: #{tpu_custom_call.1} parent=1 // pred_check
      _
    $region59: #{tpu_custom_call.1} parent=1 // pred_check_branch
      %1150 = sbr.rel (0) target = $region61
    $region60: #{tpu_custom_call.1} parent=1 // pred_region
      %1152 = vsyncadd [#allocation7], 0
      %s1154 = sshll.u32 [#allocation6], 4
      %s1155 = int_to_ptr.vmem [resolvable:$true] %s1154
      %s1156 = sshll.u32 %s13, 4
      %s1157 = int_to_ptr.hbm [resolvable:$true] %s1156
      %1159 = dma.vmem_to_hbm [thread:$0]  %s1155, 32, %s1157, [#allocation7]
    $region61: #{tpu_custom_call.1} parent=1 // pred_fallthru
      _
    // Predicated region
    $region62: #{tpu_custom_call.1} parent=1 // pred_check
      _
    $region63: #{tpu_custom_call.1} parent=1 // pred_check_branch
      %1161 = sbr.rel (0) target = $region65
    $region64: #{tpu_custom_call.1} parent=1 // pred_region
      %1163 = vsyncadd [#allocation7], 0
      %s1165 = sshll.u32 [#allocation8], 4
      %s1166 = int_to_ptr.vmem [resolvable:$true] %s1165
      %s1167 = sshll.u32 %s14, 4
      %s1168 = int_to_ptr.hbm [resolvable:$true] %s1167
      %1170 = dma.vmem_to_hbm [thread:$0]  %s1166, 32, %s1168, [#allocation7]
    $region65: #{tpu_custom_call.1} parent=1 // pred_fallthru
      _
    // Predicated region
    $region66: #{tpu_custom_call.1} parent=1 // pred_check
      _
    $region67: #{tpu_custom_call.1} parent=1 // pred_check_branch
      %1172 = sbr.rel (0) target = $region69
    $region68: #{tpu_custom_call.1} parent=1 // pred_region
      _
    $region69: #{tpu_custom_call.1} parent=1 // pred_fallthru
      _
    // Predicated region
    $region70: #{tpu_custom_call.1} parent=1 // pred_check
      _
    $region71: #{tpu_custom_call.1} parent=1 // pred_check_branch
      %1174 = sbr.rel (0) target = $region73
    $region72: #{tpu_custom_call.1} parent=1 // pred_region
      %1176 = dma.done [#allocation4], 128
    $region73: #{tpu_custom_call.1} parent=1 // pred_fallthru
      _
    // Predicated region
    $region74: #{tpu_custom_call.1} parent=1 // pred_check
      _
    $region75: #{tpu_custom_call.1} parent=1 // pred_check_branch
      %1178 = sbr.rel (0) target = $region77
    $region76: #{tpu_custom_call.1} parent=1 // pred_region
      %1180 = dma.done [#allocation7], 32
    $region77: #{tpu_custom_call.1} parent=1 // pred_fallthru
      _
    // Predicated region
    $region78: #{tpu_custom_call.1} parent=1 // pred_check
      _
    $region79: #{tpu_custom_call.1} parent=1 // pred_check_branch
      %1182 = sbr.rel (0) target = $region81
    $region80: #{tpu_custom_call.1} parent=1 // pred_region
      %1184 = dma.done [#allocation7], 32
    $region81: #{tpu_custom_call.1} parent=1 // pred_fallthru
      _
    // Predicated region
    $region82: #{tpu_custom_call.1} parent=1 // pred_check
      _
    $region83: #{tpu_custom_call.1} parent=1 // pred_check_branch
      %1186 = sbr.rel (0) target = $region85
    $region84: #{tpu_custom_call.1} parent=1 // pred_region
      _
    $region85: #{tpu_custom_call.1} parent=1 // pred_fallthru
      _
    %1187 = vsyncpa [#allocation3], 1
    %1188 = vsyncpa [#allocation4], 1
    %1189 = vsyncpa [#allocation7], 1

</llo_original>
